<compile_context>
chip_gen: v7x
topology: tpu7x:2x2x1
jax: 0.10.0
libtpu: 0.0.40
codegen_flags: <defaults>
</compile_context>

<pallas_src>
import functools

import jax
import jax.numpy as jnp
from jax import lax
from jax.experimental import pallas as pl
from jax.experimental.pallas import tpu as pltpu


# --------------------------------- helpers --------------------------------- #

def _rup(x, m):
    return (x + m - 1) // m * m


def _choose_tm(m):
    # Largest row tile that still leaves a multi-step grid (megacore friendly).
    for tm in (1024, 512, 256, 128):
        if m >= 2 * tm:
            return tm
    return min(_rup(m, 8), 1024)


def _vmem_limit_bytes():
    # cap*3/4: ~96 MiB on 128-MiB-VMEM chips (v5e/v6e), ~48 MiB on v7x (64 MiB).
    try:
        cap = int(pltpu.get_tpu_info().vmem_capacity_bytes)
        return cap * 3 // 4
    except Exception:
        return 48 * 1024 * 1024


# ----------------------------- Pallas kernel A ------------------------------ #
# conv1x1 (+ folded BN) as a row-tiled matmul + bias.

def _matmul_bias_kernel(x_ref, w_ref, b_ref, o_ref):
    acc = jnp.dot(x_ref[...], w_ref[...], preferred_element_type=jnp.float32)
    o_ref[...] = (acc + b_ref[...]).astype(o_ref.dtype)


def _matmul_bias_call(x2d, w, b, out_dtype):
    m, k = x2d.shape
    co = w.shape[1]
    tm = _choose_tm(m)
    m_pad = _rup(m, tm)
    if m_pad != m:
        x2d = jnp.pad(x2d, ((0, m_pad - m), (0, 0)))
    out_itemsize = jnp.dtype(out_dtype).itemsize
    out = pl.pallas_call(
        _matmul_bias_kernel,
        out_shape=jax.ShapeDtypeStruct((m_pad, co), out_dtype),
        grid=(m_pad // tm,),
        in_specs=[
            pl.BlockSpec((tm, k), lambda i: (i, 0)),
            pl.BlockSpec((k, co), lambda i: (0, 0)),
            pl.BlockSpec((1, co), lambda i: (0, 0)),
        ],
        out_specs=pl.BlockSpec((tm, co), lambda i: (i, 0)),
        compiler_params=pltpu.CompilerParams(
            dimension_semantics=("parallel",),
            vmem_limit_bytes=_vmem_limit_bytes()),
        cost_estimate=pl.CostEstimate(
            flops=int(2 * m_pad * k * co),
            transcendentals=0,
            bytes_accessed=int(m_pad * k * x2d.dtype.itemsize
                               + k * co * w.dtype.itemsize
                               + co * 4 + m_pad * co * out_itemsize)),
    )(x2d, w, b)
    return out[:m] if m_pad != m else out


# ----------------------------- Pallas kernel B ------------------------------ #
# Fused: conv2(3x3,stride)+bn2 -> conv3(1x1)+bn3 -> (+downsample) -> add -> ReLU
# One grid step per (image, TH-row tile); the 3x3 conv is done as 3 K-stacked
# matmuls (K = 3*cm) over the stride-phase / row-tile layout of the padded y1.

def _fused_tail_kernel(stride, th, wo_p, has_ds, *refs):
    if has_ds:
        (ph_ref, w2g_ref, b2_ref, w3_ref, b3_ref, id_ref,
         wd_ref, bd_ref, o_ref) = refs
    else:
        ph_ref, w2g_ref, b2_ref, w3_ref, b3_ref, id_ref, o_ref = refs
        wd_ref = bd_ref = None

    cm = w3_ref.shape[0]
    co = w3_ref.shape[1]
    q = 2 // stride
    thq = th + q
    r = th * wo_p

    # 3x3 conv: per kernel row kh, stack the 3 kw-taps along K and do one
    # (r, 3*cm) x (3*cm, cm) matmul, accumulating in f32.
    acc = jnp.zeros((r, cm), jnp.float32)
    for kh in range(3):
        parts = []
        for kw in range(3):
            phz = (kh % stride) * stride + (kw % stride)
            row0 = phz * thq + kh // stride           # aligned slab pick (leading dim)
            patch = ph_ref[0,
                           pl.ds(row0, th),
                           pl.ds(kw // stride, wo_p), :]       # (th, wo_p, cm)
            parts.append(patch.reshape(r, cm))
        lhs = jnp.concatenate(parts, axis=-1)                  # (r, 3*cm)
        acc = acc + jnp.dot(lhs, w2g_ref[kh],
                            preferred_element_type=jnp.float32)
    y2 = (acc + b2_ref[...]).astype(jnp.bfloat16)              # bn2 folded

    # conv3 (1x1) + bn3
    out = jnp.dot(y2, w3_ref[...], preferred_element_type=jnp.float32) + b3_ref[...]

    # identity branch (optionally a fused 1x1 stride-s downsample conv + bn)
    idv = id_ref[0].reshape(r, id_ref.shape[-1])               # bf16
    if has_ds:
        out = out + (jnp.dot(idv, wd_ref[...],
                             preferred_element_type=jnp.float32) + bd_ref[...])
    else:
        out = out + idv.astype(jnp.float32)

    o_ref[...] = jnp.maximum(out, 0.0).reshape(1, th, wo_p, co).astype(o_ref.dtype)


def _fused_tail_call(phases, w2g, b2, w3, b3, idsrc, ds_args, stride, th, wo_p):
    g, rows, wq8, cm_p = phases.shape
    co_p = w3.shape[1]
    ci_p = idsrc.shape[-1]
    has_ds = len(ds_args) > 0

    in_specs = [
        pl.BlockSpec((1, rows, wq8, cm_p), lambda i: (i, 0, 0, 0)),
        pl.BlockSpec((3, 3 * cm_p, cm_p), lambda i: (0, 0, 0)),
        pl.BlockSpec((1, cm_p), lambda i: (0, 0)),
        pl.BlockSpec((cm_p, co_p), lambda i: (0, 0)),
        pl.BlockSpec((1, co_p), lambda i: (0, 0)),
        pl.BlockSpec((1, th, wo_p, ci_p), lambda i: (i, 0, 0, 0)),
    ]
    args = [phases, w2g, b2, w3, b3, idsrc]
    if has_ds:
        wd, bd = ds_args
        in_specs += [pl.BlockSpec(wd.shape, lambda i: (0, 0)),
                     pl.BlockSpec((1, co_p), lambda i: (0, 0))]
        args += [wd, bd]

    r = th * wo_p
    flops = 2 * g * r * cm_p * (9 * cm_p + co_p)
    if has_ds:
        flops += 2 * g * r * ci_p * co_p
    bytes_accessed = (phases.size * phases.dtype.itemsize
                      + w2g.size * w2g.dtype.itemsize
                      + w3.size * w3.dtype.itemsize
                      + idsrc.size * idsrc.dtype.itemsize
                      + g * r * co_p * 2)

    kernel = functools.partial(_fused_tail_kernel, stride, th, wo_p, has_ds)
    return pl.pallas_call(
        kernel,
        out_shape=jax.ShapeDtypeStruct((g, th, wo_p, co_p), jnp.bfloat16),
        grid=(g,),
        in_specs=in_specs,
        out_specs=pl.BlockSpec((1, th, wo_p, co_p), lambda i: (i, 0, 0, 0)),
        compiler_params=pltpu.CompilerParams(
            dimension_semantics=("parallel",),
            vmem_limit_bytes=_vmem_limit_bytes()),
        cost_estimate=pl.CostEstimate(flops=int(flops), transcendentals=0,
                                      bytes_accessed=int(bytes_accessed)),
    )(*args)


# ------------------------------ glue helpers ------------------------------- #

def _phase_split_tiles(y1, stride, th, n_tiles, wo_p, wq8):
    # y1: (N, H, W, C) -> (N*n_tiles, s^2*(th+q), wq8, C).
    # For each image and each TH-row output tile, the slab holds the s^2 stride
    # phases of the zero-padded (pad=1) y1, each th+q rows tall (q-row halo) and
    # wq8 (8-aligned) columns wide.  A 3x3/stride-s tap (kh,kw) then reads the
    # contiguous window rows [phz*(th+q)+kh//s, +th), cols [kw//s, +wo_p).
    n, h, w, c = y1.shape
    q = 2 // stride
    thq = th + q
    hq = n_tiles * th + q
    y1p = jnp.pad(y1, ((0, 0), (1, 1), (1, 1), (0, 0)))
    planes = []
    for a in range(stride):
        for b in range(stride):
            ph = y1p[:, a::stride, b::stride, :][:, :hq, :wq8, :]
            ph = jnp.pad(ph, ((0, 0), (0, hq - ph.shape[1]),
                              (0, wq8 - ph.shape[2]), (0, 0)))
            planes.append(ph)
    P = jnp.stack(planes, axis=1)                     # (n, s^2, hq, wq8, c)
    tiles = [P[:, :, t * th: t * th + thq] for t in range(n_tiles)]
    Pt = jnp.stack(tiles, axis=1)                     # (n, n_tiles, s^2, thq, wq8, c)
    s2 = stride * stride
    return Pt.reshape(n * n_tiles, s2 * thq, wq8, c)


# ----------------------- one-time parameter preparation --------------------- #

def prepare_residual_block(params, stride, eps=1e-3):
    """Fold BN into the conv weights, pad to lane-dense shapes, cast to bf16.
    Run ONCE outside the per-step forward (hoisted weight prep)."""
    cmid = params["conv1"].shape[0]
    cin = params["conv1"].shape[1]
    cout = params["conv3"].shape[0]
    cin_p, cm_p, co_p = _rup(cin, 128), _rup(cmid, 128), _rup(cout, 128)

    def fold(bn):
        gamma, beta, mean, var = bn
        scale = gamma / jnp.sqrt(var + eps)
        return scale, beta - mean * scale

    def prep1x1(wconv, bn, ci, cip, cn, cnp):
        scale, bias = fold(bn)
        wm = jnp.transpose(wconv[:, :, 0, 0]) * scale[None, :]        # (ci, cn)
        wm = jnp.pad(wm, ((0, cip - ci), (0, cnp - cn))).astype(jnp.bfloat16)
        bb = jnp.pad(bias, (0, cnp - cn)).astype(jnp.float32).reshape(1, cnp)
        return wm, bb

    w1, b1 = prep1x1(params["conv1"], params["bn1"], cin, cin_p, cmid, cm_p)
    w3, b3 = prep1x1(params["conv3"], params["bn3"], cmid, cm_p, cout, co_p)

    s2scale, b2bias = fold(params["bn2"])
    w2 = jnp.transpose(params["conv2"], (2, 3, 1, 0)) * s2scale[None, None, None, :]
    w2 = jnp.pad(w2, ((0, 0), (0, 0), (0, cm_p - cmid), (0, cm_p - cmid)))
    w2g = w2.reshape(3, 3 * cm_p, cm_p).astype(jnp.bfloat16)   # kw taps stacked on K
    b2 = jnp.pad(b2bias, (0, cm_p - cmid)).astype(jnp.float32).reshape(1, cm_p)

    prep = dict(w1=w1, b1=b1, w2g=w2g, b2=b2, w3=w3, b3=b3)
    has_ds = "conv_ds" in params
    if has_ds:
        wd, bd = prep1x1(params["conv_ds"], params["bn_ds"], cin, cin_p, cout, co_p)
        prep["wd"], prep["bd"] = wd, bd
    cfg = dict(stride=int(stride), cin=int(cin), cmid=int(cmid), cout=int(cout),
               cin_p=int(cin_p), cm_p=int(cm_p), co_p=int(co_p), has_ds=bool(has_ds))
    return prep, cfg


# -------------------------- module forward (Pallas) ------------------------ #

def residual_block_forward(x_nchw, prep, *, cfg):
    stride = cfg["stride"]
    cin, cout = cfg["cin"], cfg["cout"]
    cin_p, cm_p, co_p = cfg["cin_p"], cfg["cm_p"], cfg["co_p"]

    x = jnp.transpose(x_nchw, (0, 2, 3, 1))                 # NCHW -> NHWC
    n, h, w, _ = x.shape

    ho = (h - 1) // stride + 1
    wo = (w - 1) // stride + 1
    wo_p = _rup(wo, 8)
    th = 8 if ho <= 16 else 16                              # spatial row tile
    n_tiles = -(-ho // th)
    ho_pad = n_tiles * th
    q = 2 // stride
    wq8 = _rup(wo_p + q, 8)

    xp = jnp.pad(x, ((0, 0), (0, 0), (0, 0), (0, cin_p - cin))).astype(jnp.bfloat16)

    # ---- stage A: conv1 (1x1, stride 1) + bn1 as a row-tiled matmul ----
    y1 = _matmul_bias_call(xp.reshape(n * h * w, cin_p), prep["w1"], prep["b1"],
                           jnp.bfloat16)
    y1 = y1.reshape(n, h, w, cm_p)

    # ---- phase split + row-tile (halo) relayout for the fused 3x3 stage ----
    phases_t = _phase_split_tiles(y1, stride, th, n_tiles, wo_p, wq8)

    # ---- identity branch source (bf16, tiled like the output) ----
    if cfg["has_ds"]:
        idf = xp[:, ::stride, ::stride, :]                  # (n, ho, wo, cin_p)
        ds_args = (prep["wd"], prep["bd"])
    else:
        idf = xp                                            # stride==1, cin_p==co_p
        ds_args = ()
    idf = jnp.pad(idf, ((0, 0), (0, ho_pad - idf.shape[1]),
                        (0, wo_p - idf.shape[2]), (0, 0)))
    id_t = idf.reshape(n * n_tiles, th, wo_p, idf.shape[-1])

    # ---- stage B: fused conv2+bn2 + conv3+bn3 (+downsample) + add + ReLU ----
    out = _fused_tail_call(phases_t, prep["w2g"], prep["b2"], prep["w3"], prep["b3"],
                           id_t, ds_args, stride, th, wo_p)
    out = out.reshape(n, ho_pad, wo_p, co_p)[:, :ho, :wo, :cout]
    return jnp.transpose(out, (0, 3, 1, 2)).astype(jnp.float32)   # NHWC -> NCHW


# ----------------------- deterministic parameter init ---------------------- #

def residual_block_params(key, in_channel, out_channel, stride):
    channel = out_channel // 4  # expansion = 4
    keys = jax.random.split(key, 8)

    def conv(k, cout, cin, kh, kw):
        return 0.1 * jax.random.normal(k, (cout, cin, kh, kw), jnp.float32)

    def bn(k, c):
        k1, k2, k3, k4 = jax.random.split(k, 4)
        gamma = 1.0 + 0.1 * jax.random.normal(k1, (c,), jnp.float32)
        beta = 0.1 * jax.random.normal(k2, (c,), jnp.float32)
        mean = 0.1 * jax.random.normal(k3, (c,), jnp.float32)
        var = jnp.abs(jax.random.normal(k4, (c,), jnp.float32)) + 0.5
        return (gamma, beta, mean, var)

    params = {
        "conv1": conv(keys[0], channel, in_channel, 1, 1),
        "bn1": bn(keys[1], channel),
        "conv2": conv(keys[2], channel, channel, 3, 3),
        "bn2": bn(keys[3], channel),
        "conv3": conv(keys[4], out_channel, channel, 1, 1),
        "bn3": bn(keys[5], out_channel),
    }
    if stride != 1 or in_channel != out_channel:
        params["conv_ds"] = conv(keys[6], out_channel, in_channel, 1, 1)
        params["bn_ds"] = bn(keys[7], out_channel)
    return params


# --------------------------- pure-JAX reference ----------------------------- #

def _conv_ref(x, w, stride, padding):
    return lax.conv_general_dilated(
        x, w, (stride, stride), [(padding, padding)] * 2,
        dimension_numbers=("NCHW", "OIHW", "NCHW"))


def _bn_ref(x, gamma, beta, mean, var, eps=1e-3):
    g = gamma.reshape(1, -1, 1, 1)
    b = beta.reshape(1, -1, 1, 1)
    m = mean.reshape(1, -1, 1, 1)
    v = var.reshape(1, -1, 1, 1)
    return (x - m) / jnp.sqrt(v + eps) * g + b


def residual_block_reference(x, params, stride):
    out = _bn_ref(_conv_ref(x, params["conv1"], 1, 0), *params["bn1"])
    out = _bn_ref(_conv_ref(out, params["conv2"], stride, 1), *params["bn2"])
    out = _bn_ref(_conv_ref(out, params["conv3"], 1, 0), *params["bn3"])
    if "conv_ds" in params:
        identity = _bn_ref(_conv_ref(x, params["conv_ds"], stride, 0),
                           *params["bn_ds"])
    else:
        identity = x
    return jnp.maximum(out + identity, 0.0)


# ----------------------------------- main ----------------------------------- #

if __name__ == "__main__":
    key = jax.random.PRNGKey(0)
    kx, kp, kx2, kp2 = jax.random.split(key, 4)

    # Config 1: stride-2 bottleneck with a downsample branch.
    N, IN_C, OUT_C, H, W, STRIDE = 2, 4, 16, 16, 16, 2
    x = jax.random.normal(kx, (N, IN_C, H, W), jnp.float32)      # NCHW, as PyTorch
    params = residual_block_params(kp, IN_C, OUT_C, STRIDE)
    prep, cfg = prepare_residual_block(params, STRIDE)           # hoisted weight prep
    fwd = jax.jit(functools.partial(residual_block_forward, cfg=cfg))
    out = fwd(x, prep)
    jax.block_until_ready(out)
    ref = residual_block_reference(x, params, STRIDE)
    assert out.shape == ref.shape, (out.shape, ref.shape)
    # bf16 activations/weights/outputs (f32 MXU accumulation) vs a pure-f32 ref.
    assert jnp.allclose(out, ref, rtol=2e-2, atol=2e-2), float(
        jnp.max(jnp.abs(out - ref)))

    # Config 2: stride-1 identity block (no downsample branch).
    N2, C2, H2, W2 = 2, 16, 8, 8
    x2 = jax.random.normal(kx2, (N2, C2, H2, W2), jnp.float32)
    params2 = residual_block_params(kp2, C2, C2, 1)
    prep2, cfg2 = prepare_residual_block(params2, 1)
    fwd2 = jax.jit(functools.partial(residual_block_forward, cfg=cfg2))
    out2 = fwd2(x2, prep2)
    jax.block_until_ready(out2)
    ref2 = residual_block_reference(x2, params2, 1)
    assert out2.shape == ref2.shape, (out2.shape, ref2.shape)
    assert jnp.allclose(out2, ref2, rtol=2e-2, atol=2e-2), float(
        jnp.max(jnp.abs(out2 - ref2)))

    print("KERNEL_OK")
</pallas_src>

<mosaic_0001>
module attributes {stable_mosaic.version = 11 : i64} {
  func.func @_matmul_bias_kernel(%arg0: i32, %arg1: memref<256x128xbf16, #tpu.memory_space<vmem>>, %arg2: memref<128x128xbf16, #tpu.memory_space<vmem>>, %arg3: memref<1x128xf32, #tpu.memory_space<vmem>>, %arg4: memref<256x128xbf16, #tpu.memory_space<vmem>>) attributes {dimension_semantics = [#tpu.dimension_semantics<parallel>], iteration_bounds = array<i64: 2>, scalar_prefetch = 0 : i64, scratch_operands = 0 : i64, tpu.core_type = #tpu.core_type<tc>, window_params = [{transform_indices = @transform_0, window_bounds = array<i64: 256, 128>}, {pipeline_mode = #tpu.pipeline_mode<synchronous>, transform_indices = @transform_1, window_bounds = array<i64: 128, 128>}, {pipeline_mode = #tpu.pipeline_mode<synchronous>, transform_indices = @transform_2, window_bounds = array<i64: 1, 128>}, {transform_indices = @transform_3, window_bounds = array<i64: 256, 128>}]} {
    %c0 = arith.constant 0 : index
    %c0_0 = arith.constant 0 : index
    %0 = vector.load %arg1[%c0, %c0_0] : memref<256x128xbf16, #tpu.memory_space<vmem>>, vector<256x128xbf16>
    %c0_1 = arith.constant 0 : index
    %c0_2 = arith.constant 0 : index
    %1 = vector.load %arg2[%c0_1, %c0_2] : memref<128x128xbf16, #tpu.memory_space<vmem>>, vector<128x128xbf16>
    %cst = arith.constant dense<0.000000e+00> : vector<256x128xf32>
    %2 = tpu.matmul %0, %1, %cst {dimension_numbers = #tpu.dot_dimension_numbers<[1], [0], [0], [1], [0, 0, 1, 1], [], []>} : vector<256x128xbf16>, vector<128x128xbf16>, vector<256x128xf32> -> vector<256x128xf32>
    %c0_3 = arith.constant 0 : index
    %c0_4 = arith.constant 0 : index
    %3 = vector.load %arg3[%c0_3, %c0_4] : memref<1x128xf32, #tpu.memory_space<vmem>>, vector<1x128xf32>
    %4 = vector.broadcast %3 : vector<1x128xf32> to vector<256x128xf32>
    %5 = arith.addf %2, %4 : vector<256x128xf32>
    %6 = arith.truncf %5 : vector<256x128xf32> to vector<256x128xbf16>
    %c0_5 = arith.constant 0 : index
    %c0_6 = arith.constant 0 : index
    %7 = vector.load %arg4[%c0_5, %c0_6] : memref<256x128xbf16, #tpu.memory_space<vmem>>, vector<256x128xbf16>
    tpu.vector_store %arg4[%c0_5, %c0_6], %6 {strides = array<i32>} : memref<256x128xbf16, #tpu.memory_space<vmem>>, vector<256x128xbf16>,
    return
  }
  func.func @transform_0(%arg0: i32) -> (i32, i32) {
    %c0_i32 = arith.constant 0 : i32
    %c0_i32_0 = arith.constant 0 : i32
    return %arg0, %c0_i32 : i32, i32
  }
  func.func @transform_1(%arg0: i32) -> (i32, i32) {
    %c0_i32 = arith.constant 0 : i32
    %c0_i32_0 = arith.constant 0 : i32
    %c0_i32_1 = arith.constant 0 : i32
    return %c0_i32, %c0_i32_0 : i32, i32
  }
  func.func @transform_2(%arg0: i32) -> (i32, i32) {
    %c0_i32 = arith.constant 0 : i32
    %c0_i32_0 = arith.constant 0 : i32
    %c0_i32_1 = arith.constant 0 : i32
    return %c0_i32, %c0_i32_0 : i32, i32
  }
  func.func @transform_3(%arg0: i32) -> (i32, i32) {
    %c0_i32 = arith.constant 0 : i32
    %c0_i32_0 = arith.constant 0 : i32
    return %arg0, %c0_i32 : i32, i32
  }
}

module attributes {stable_mosaic.version = 11 : i64} {
  func.func @_fused_tail_kernel(%arg0: i32, %arg1: memref<1x36x16x128xbf16, #tpu.memory_space<vmem>>, %arg2: memref<3x384x128xbf16, #tpu.memory_space<vmem>>, %arg3: memref<1x128xf32, #tpu.memory_space<vmem>>, %arg4: memref<128x128xbf16, #tpu.memory_space<vmem>>, %arg5: memref<1x128xf32, #tpu.memory_space<vmem>>, %arg6: memref<1x8x8x128xbf16, #tpu.memory_space<vmem>>, %arg7: memref<128x128xbf16, #tpu.memory_space<vmem>>, %arg8: memref<1x128xf32, #tpu.memory_space<vmem>>, %arg9: memref<1x8x8x128xbf16, #tpu.memory_space<vmem>>) attributes {dimension_semantics = [#tpu.dimension_semantics<parallel>], iteration_bounds = array<i64: 2>, scalar_prefetch = 0 : i64, scratch_operands = 0 : i64, tpu.core_type = #tpu.core_type<tc>, window_params = [{transform_indices = @transform_0, window_bounds = array<i64: 1, 36, 16, 128>}, {pipeline_mode = #tpu.pipeline_mode<synchronous>, transform_indices = @transform_1, window_bounds = array<i64: 3, 384, 128>}, {pipeline_mode = #tpu.pipeline_mode<synchronous>, transform_indices = @transform_2, window_bounds = array<i64: 1, 128>}, {pipeline_mode = #tpu.pipeline_mode<synchronous>, transform_indices = @transform_3, window_bounds = array<i64: 128, 128>}, {pipeline_mode = #tpu.pipeline_mode<synchronous>, transform_indices = @transform_4, window_bounds = array<i64: 1, 128>}, {transform_indices = @transform_5, window_bounds = array<i64: 1, 8, 8, 128>}, {pipeline_mode = #tpu.pipeline_mode<synchronous>, transform_indices = @transform_6, window_bounds = array<i64: 128, 128>}, {pipeline_mode = #tpu.pipeline_mode<synchronous>, transform_indices = @transform_7, window_bounds = array<i64: 1, 128>}, {transform_indices = @transform_8, window_bounds = array<i64: 1, 8, 8, 128>}]} {
    %cst = arith.constant 0.000000e+00 : f32
    %0 = vector.broadcast %cst : f32 to vector<64x128xf32>
    %c0 = arith.constant 0 : index
    %c0_0 = arith.constant 0 : index
    %c0_1 = arith.constant 0 : index
    %c0_2 = arith.constant 0 : index
    %1 = vector.load %arg1[%c0, %c0_0, %c0_1, %c0_2] : memref<1x36x16x128xbf16, #tpu.memory_space<vmem>>, vector<1x8x8x128xbf16>
    %2 = vector.shape_cast %1 : vector<1x8x8x128xbf16> to vector<8x8x128xbf16>
    %3 = vector.shape_cast %2 : vector<8x8x128xbf16> to vector<64x128xbf16>
    %c0_3 = arith.constant 0 : index
    %c9 = arith.constant 9 : index
    %c0_4 = arith.constant 0 : index
    %c0_5 = arith.constant 0 : index
    %4 = vector.load %arg1[%c0_3, %c9, %c0_4, %c0_5] : memref<1x36x16x128xbf16, #tpu.memory_space<vmem>>, vector<1x8x8x128xbf16>
    %5 = vector.shape_cast %4 : vector<1x8x8x128xbf16> to vector<8x8x128xbf16>
    %6 = vector.shape_cast %5 : vector<8x8x128xbf16> to vector<64x128xbf16>
    %c0_6 = arith.constant 0 : index
    %c0_7 = arith.constant 0 : index
    %c1 = arith.constant 1 : index
    %c0_8 = arith.constant 0 : index
    %7 = vector.load %arg1[%c0_6, %c0_7, %c1, %c0_8] : memref<1x36x16x128xbf16, #tpu.memory_space<vmem>>, vector<1x8x8x128xbf16>
    %8 = vector.shape_cast %7 : vector<1x8x8x128xbf16> to vector<8x8x128xbf16>
    %9 = vector.shape_cast %8 : vector<8x8x128xbf16> to vector<64x128xbf16>
    %10 = tpu.concatenate %3, %6, %9 in 1 : vector<64x128xbf16>, vector<64x128xbf16>, vector<64x128xbf16> -> vector<64x384xbf16>
    %c0_9 = arith.constant 0 : index
    %c0_10 = arith.constant 0 : index
    %c0_11 = arith.constant 0 : index
    %11 = vector.load %arg2[%c0_9, %c0_10, %c0_11] : memref<3x384x128xbf16, #tpu.memory_space<vmem>>, vector<1x384x128xbf16>
    %12 = vector.shape_cast %11 : vector<1x384x128xbf16> to vector<384x128xbf16>
    %cst_12 = arith.constant dense<0.000000e+00> : vector<64x128xf32>
    %13 = tpu.matmul %10, %12, %cst_12 {dimension_numbers = #tpu.dot_dimension_numbers<[1], [0], [0], [1], [0, 0, 1, 1], [], []>} : vector<64x384xbf16>, vector<384x128xbf16>, vector<64x128xf32> -> vector<64x128xf32>
    %14 = arith.addf %0, %13 : vector<64x128xf32>
    %c0_13 = arith.constant 0 : index
    %c18 = arith.constant 18 : index
    %c0_14 = arith.constant 0 : index
    %c0_15 = arith.constant 0 : index
    %15 = vector.load %arg1[%c0_13, %c18, %c0_14, %c0_15] : memref<1x36x16x128xbf16, #tpu.memory_space<vmem>>, vector<1x8x8x128xbf16>
    %16 = vector.shape_cast %15 : vector<1x8x8x128xbf16> to vector<8x8x128xbf16>
    %17 = vector.shape_cast %16 : vector<8x8x128xbf16> to vector<64x128xbf16>
    %c0_16 = arith.constant 0 : index
    %c27 = arith.constant 27 : index
    %c0_17 = arith.constant 0 : index
    %c0_18 = arith.constant 0 : index
    %18 = vector.load %arg1[%c0_16, %c27, %c0_17, %c0_18] : memref<1x36x16x128xbf16, #tpu.memory_space<vmem>>, vector<1x8x8x128xbf16>
    %19 = vector.shape_cast %18 : vector<1x8x8x128xbf16> to vector<8x8x128xbf16>
    %20 = vector.shape_cast %19 : vector<8x8x128xbf16> to vector<64x128xbf16>
    %c0_19 = arith.constant 0 : index
    %c18_20 = arith.constant 18 : index
    %c1_21 = arith.constant 1 : index
    %c0_22 = arith.constant 0 : index
    %21 = vector.load %arg1[%c0_19, %c18_20, %c1_21, %c0_22] : memref<1x36x16x128xbf16, #tpu.memory_space<vmem>>, vector<1x8x8x128xbf16>
    %22 = vector.shape_cast %21 : vector<1x8x8x128xbf16> to vector<8x8x128xbf16>
    %23 = vector.shape_cast %22 : vector<8x8x128xbf16> to vector<64x128xbf16>
    %24 = tpu.concatenate %17, %20, %23 in 1 : vector<64x128xbf16>, vector<64x128xbf16>, vector<64x128xbf16> -> vector<64x384xbf16>
    %c1_23 = arith.constant 1 : index
    %c0_24 = arith.constant 0 : index
    %c0_25 = arith.constant 0 : index
    %25 = vector.load %arg2[%c1_23, %c0_24, %c0_25] : memref<3x384x128xbf16, #tpu.memory_space<vmem>>, vector<1x384x128xbf16>
    %26 = vector.shape_cast %25 : vector<1x384x128xbf16> to vector<384x128xbf16>
    %cst_26 = arith.constant dense<0.000000e+00> : vector<64x128xf32>
    %27 = tpu.matmul %24, %26, %cst_26 {dimension_numbers = #tpu.dot_dimension_numbers<[1], [0], [0], [1], [0, 0, 1, 1], [], []>} : vector<64x384xbf16>, vector<384x128xbf16>, vector<64x128xf32> -> vector<64x128xf32>
    %28 = arith.addf %14, %27 : vector<64x128xf32>
    %c0_27 = arith.constant 0 : index
    %c1_28 = arith.constant 1 : index
    %c0_29 = arith.constant 0 : index
    %c0_30 = arith.constant 0 : index
    %29 = vector.load %arg1[%c0_27, %c1_28, %c0_29, %c0_30] : memref<1x36x16x128xbf16, #tpu.memory_space<vmem>>, vector<1x8x8x128xbf16>
    %30 = vector.shape_cast %29 : vector<1x8x8x128xbf16> to vector<8x8x128xbf16>
    %31 = vector.shape_cast %30 : vector<8x8x128xbf16> to vector<64x128xbf16>
    %c0_31 = arith.constant 0 : index
    %c10 = arith.constant 10 : index
    %c0_32 = arith.constant 0 : index
    %c0_33 = arith.constant 0 : index
    %32 = vector.load %arg1[%c0_31, %c10, %c0_32, %c0_33] : memref<1x36x16x128xbf16, #tpu.memory_space<vmem>>, vector<1x8x8x128xbf16>
    %33 = vector.shape_cast %32 : vector<1x8x8x128xbf16> to vector<8x8x128xbf16>
    %34 = vector.shape_cast %33 : vector<8x8x128xbf16> to vector<64x128xbf16>
    %c0_34 = arith.constant 0 : index
    %c1_35 = arith.constant 1 : index
    %c1_36 = arith.constant 1 : index
    %c0_37 = arith.constant 0 : index
    %35 = vector.load %arg1[%c0_34, %c1_35, %c1_36, %c0_37] : memref<1x36x16x128xbf16, #tpu.memory_space<vmem>>, vector<1x8x8x128xbf16>
    %36 = vector.shape_cast %35 : vector<1x8x8x128xbf16> to vector<8x8x128xbf16>
    %37 = vector.shape_cast %36 : vector<8x8x128xbf16> to vector<64x128xbf16>
    %38 = tpu.concatenate %31, %34, %37 in 1 : vector<64x128xbf16>, vector<64x128xbf16>, vector<64x128xbf16> -> vector<64x384xbf16>
    %c2 = arith.constant 2 : index
    %c0_38 = arith.constant 0 : index
    %c0_39 = arith.constant 0 : index
    %39 = vector.load %arg2[%c2, %c0_38, %c0_39] : memref<3x384x128xbf16, #tpu.memory_space<vmem>>, vector<1x384x128xbf16>
    %40 = vector.shape_cast %39 : vector<1x384x128xbf16> to vector<384x128xbf16>
    %cst_40 = arith.constant dense<0.000000e+00> : vector<64x128xf32>
    %41 = tpu.matmul %38, %40, %cst_40 {dimension_numbers = #tpu.dot_dimension_numbers<[1], [0], [0], [1], [0, 0, 1, 1], [], []>} : vector<64x384xbf16>, vector<384x128xbf16>, vector<64x128xf32> -> vector<64x128xf32>
    %42 = arith.addf %28, %41 : vector<64x128xf32>
    %c0_41 = arith.constant 0 : index
    %c0_42 = arith.constant 0 : index
    %43 = vector.load %arg3[%c0_41, %c0_42] : memref<1x128xf32, #tpu.memory_space<vmem>>, vector<1x128xf32>
    %44 = vector.broadcast %43 : vector<1x128xf32> to vector<64x128xf32>
    %45 = arith.addf %42, %44 : vector<64x128xf32>
    %46 = arith.truncf %45 : vector<64x128xf32> to vector<64x128xbf16>
    %c0_43 = arith.constant 0 : index
    %c0_44 = arith.constant 0 : index
    %47 = vector.load %arg4[%c0_43, %c0_44] : memref<128x128xbf16, #tpu.memory_space<vmem>>, vector<128x128xbf16>
    %cst_45 = arith.constant dense<0.000000e+00> : vector<64x128xf32>
    %48 = tpu.matmul %46, %47, %cst_45 {dimension_numbers = #tpu.dot_dimension_numbers<[1], [0], [0], [1], [0, 0, 1, 1], [], []>} : vector<64x128xbf16>, vector<128x128xbf16>, vector<64x128xf32> -> vector<64x128xf32>
    %c0_46 = arith.constant 0 : index
    %c0_47 = arith.constant 0 : index
    %49 = vector.load %arg5[%c0_46, %c0_47] : memref<1x128xf32, #tpu.memory_space<vmem>>, vector<1x128xf32>
    %50 = vector.broadcast %49 : vector<1x128xf32> to vector<64x128xf32>
    %51 = arith.addf %48, %50 : vector<64x128xf32>
    %c0_48 = arith.constant 0 : index
    %c0_49 = arith.constant 0 : index
    %c0_50 = arith.constant 0 : index
    %c0_51 = arith.constant 0 : index
    %52 = vector.load %arg6[%c0_48, %c0_49, %c0_50, %c0_51] : memref<1x8x8x128xbf16, #tpu.memory_space<vmem>>, vector<1x8x8x128xbf16>
    %53 = vector.shape_cast %52 : vector<1x8x8x128xbf16> to vector<8x8x128xbf16>
    %54 = vector.shape_cast %53 : vector<8x8x128xbf16> to vector<64x128xbf16>
    %c0_52 = arith.constant 0 : index
    %c0_53 = arith.constant 0 : index
    %55 = vector.load %arg7[%c0_52, %c0_53] : memref<128x128xbf16, #tpu.memory_space<vmem>>, vector<128x128xbf16>
    %cst_54 = arith.constant dense<0.000000e+00> : vector<64x128xf32>
    %56 = tpu.matmul %54, %55, %cst_54 {dimension_numbers = #tpu.dot_dimension_numbers<[1], [0], [0], [1], [0, 0, 1, 1], [], []>} : vector<64x128xbf16>, vector<128x128xbf16>, vector<64x128xf32> -> vector<64x128xf32>
    %c0_55 = arith.constant 0 : index
    %c0_56 = arith.constant 0 : index
    %57 = vector.load %arg8[%c0_55, %c0_56] : memref<1x128xf32, #tpu.memory_space<vmem>>, vector<1x128xf32>
    %58 = vector.broadcast %57 : vector<1x128xf32> to vector<64x128xf32>
    %59 = arith.addf %56, %58 : vector<64x128xf32>
    %60 = arith.addf %51, %59 : vector<64x128xf32>
    %cst_57 = arith.constant 0.000000e+00 : f32
    %61 = vector.broadcast %cst_57 : f32 to vector<64x128xf32>
    %62 = arith.maximumf %60, %61 : vector<64x128xf32>
    %63 = vector.shape_cast %62 : vector<64x128xf32> to vector<1x8x8x128xf32>
    %64 = arith.truncf %63 : vector<1x8x8x128xf32> to vector<1x8x8x128xbf16>
    %c0_58 = arith.constant 0 : index
    %c0_59 = arith.constant 0 : index
    %c0_60 = arith.constant 0 : index
    %c0_61 = arith.constant 0 : index
    %65 = vector.load %arg9[%c0_58, %c0_59, %c0_60, %c0_61] : memref<1x8x8x128xbf16, #tpu.memory_space<vmem>>, vector<1x8x8x128xbf16>
    tpu.vector_store %arg9[%c0_58, %c0_59, %c0_60, %c0_61], %64 {strides = array<i32>} : memref<1x8x8x128xbf16, #tpu.memory_space<vmem>>, vector<1x8x8x128xbf16>,
    return
  }
  func.func @transform_0(%arg0: i32) -> (i32, i32, i32, i32) {
    %c0_i32 = arith.constant 0 : i32
    %c0_i32_0 = arith.constant 0 : i32
    %c0_i32_1 = arith.constant 0 : i32
    %c0_i32_2 = arith.constant 0 : i32
    return %arg0, %c0_i32, %c0_i32_0, %c0_i32_1 : i32, i32, i32, i32
  }
  func.func @transform_1(%arg0: i32) -> (i32, i32, i32) {
    %c0_i32 = arith.constant 0 : i32
    %c0_i32_0 = arith.constant 0 : i32
    %c0_i32_1 = arith.constant 0 : i32
    %c0_i32_2 = arith.constant 0 : i32
    return %c0_i32, %c0_i32_0, %c0_i32_1 : i32, i32, i32
  }
  func.func @transform_2(%arg0: i32) -> (i32, i32) {
    %c0_i32 = arith.constant 0 : i32
    %c0_i32_0 = arith.constant 0 : i32
    %c0_i32_1 = arith.constant 0 : i32
    return %c0_i32, %c0_i32_0 : i32, i32
  }
  func.func @transform_3(%arg0: i32) -> (i32, i32) {
    %c0_i32 = arith.constant 0 : i32
    %c0_i32_0 = arith.constant 0 : i32
    %c0_i32_1 = arith.constant 0 : i32
    return %c0_i32, %c0_i32_0 : i32, i32
  }
  func.func @transform_4(%arg0: i32) -> (i32, i32) {
    %c0_i32 = arith.constant 0 : i32
    %c0_i32_0 = arith.constant 0 : i32
    %c0_i32_1 = arith.constant 0 : i32
    return %c0_i32, %c0_i32_0 : i32, i32
  }
  func.func @transform_5(%arg0: i32) -> (i32, i32, i32, i32) {
    %c0_i32 = arith.constant 0 : i32
    %c0_i32_0 = arith.constant 0 : i32
    %c0_i32_1 = arith.constant 0 : i32
    %c0_i32_2 = arith.constant 0 : i32
    return %arg0, %c0_i32, %c0_i32_0, %c0_i32_1 : i32, i32, i32, i32
  }
  func.func @transform_6(%arg0: i32) -> (i32, i32) {
    %c0_i32 = arith.constant 0 : i32
    %c0_i32_0 = arith.constant 0 : i32
    %c0_i32_1 = arith.constant 0 : i32
    return %c0_i32, %c0_i32_0 : i32, i32
  }
  func.func @transform_7(%arg0: i32) -> (i32, i32) {
    %c0_i32 = arith.constant 0 : i32
    %c0_i32_0 = arith.constant 0 : i32
    %c0_i32_1 = arith.constant 0 : i32
    return %c0_i32, %c0_i32_0 : i32, i32
  }
  func.func @transform_8(%arg0: i32) -> (i32, i32, i32, i32) {
    %c0_i32 = arith.constant 0 : i32
    %c0_i32_0 = arith.constant 0 : i32
    %c0_i32_1 = arith.constant 0 : i32
    %c0_i32_2 = arith.constant 0 : i32
    return %arg0, %c0_i32, %c0_i32_0, %c0_i32_1 : i32, i32, i32, i32
  }
}

</mosaic_0001>

<llo_original>
// kernel: residual_block_forward.2
$region0: #{residual_block_forward.2}
  #allocation0 [shape = 'u32[]', space=smem, size = 0x4, offset = 0x4, fixed_abs, tag = 'smem constant byte address 0x4 - core index']
  #allocation1 [shape = 'u32[144,128]{1,0:T(1,128)}', space=vmem, size = 0x12000, scoped, tag = 'internal scratch']
  %s0 = inlined_call_operand.vmem [shape: bf16[512,128], index: 0, kind: input, shape index: {}]
  %s1 = inlined_call_operand.vmem [shape: bf16[128,128], index: 1, kind: input, shape index: {}]
  %s2 = inlined_call_operand.vmem [shape: f32[1,128], index: 2, kind: input, shape index: {}]
  %s3 = inlined_call_operand.vmem [shape: bf16[512,128], index: 3, kind: output, shape index: {}]
  %s4 = sld [smem:[#allocation0]]
  $region45: #{residual_block_forward.2} parent=0
    _
  %s6 = ssub.s32 1, %s4
  %s7 = scalar_select 0, %s6, %s4
  loop: start=0, step=1, limit=4
  $region2: #{residual_block_forward.2} parent=0 // loop_pre_header
    _
  $region3: #{residual_block_forward.2} parent=0 // loop_header
    %s9 = sphi 0, %s13
    %p10 = scmp.ge.s32.totalorder %s9, 4
    %s19 = sphi 0, %s21
    %s22 = sphi 0, %s19
    %s23 = sphi 0, %s22
    %s39 = sphi 0, %s23
    %s43 = sphi 0, %s43
    %s45 = sphi 0, %s43
    %s46 = sphi 0, %s45
    %s60 = sphi 0, %s46
    %s64 = sphi 0, %s64
    %s66 = sphi 0, %s64
    %s67 = sphi 0, %s66
    %s81 = sphi 0, %s67
    %s87 = sphi 0, %s89
    %s90 = sphi 0, %s87
    %s91 = sphi 0, %s90
    %s107 = sphi 0, %s91
  $region4: #{residual_block_forward.2} parent=0 // loop_header_branch
    %12 = sbr.rel (%p10) target = $region8
  $region5: #{residual_block_forward.2} parent=0 // loop_body
    %s14 = ssub.s32 %s9, 1
    %s15 = ssub.s32 %s9, 2
    %s16 = sadd.s32 %s9, 1
    %s17 = ssub.s32 %s9, %s16
    %p18 = scmp.eq.s32.totalorder %s17, 0
    %s20 = sadd.s32 %s19, 1
    %s21 = scalar_select %p18, %s19, %s20
    %p24 = pneg %p18
    %p25 = scmp.eq.s32.totalorder %s9, 1
    %p26 = por %p24, %p25
    %p27 = scmp.ne.s32.totalorder %s19, %s22
    %p28 = scmp.eq.s32.totalorder %s9, 0
    %p29 = por %p27, %p28
    %p30 = scmp.ne.s32.totalorder %s19, %s22
    %p31 = scmp.eq.s32.totalorder %s14, 1
    %p32 = por %p30, %p31
    %p33 = scmp.ne.s32.totalorder %s22, %s23
    %p34 = scmp.eq.s32.totalorder %s14, 0
    %p35 = por %p33, %p34
    %p36 = scmp.ne.s32.totalorder %s22, %s23
    %p37 = scmp.eq.s32.totalorder %s15, 1
    %p38 = por %p36, %p37
    %p40 = scmp.ne.s32.totalorder %s23, %s39
    %p41 = scmp.eq.s32.totalorder %s15, 0
    %p42 = por %p40, %p41
    %s44 = sadd.s32 %s43, 1
    %p47 = scmp.eq.s32.totalorder %s9, 1
    %p48 = scmp.ne.s32.totalorder %s43, %s45
    %p49 = scmp.eq.s32.totalorder %s9, 0
    %p50 = por %p48, %p49
    %p51 = scmp.ne.s32.totalorder %s43, %s45
    %p52 = scmp.eq.s32.totalorder %s14, 1
    %p53 = por %p51, %p52
    %p54 = scmp.ne.s32.totalorder %s45, %s46
    %p55 = scmp.eq.s32.totalorder %s14, 0
    %p56 = por %p54, %p55
    %p57 = scmp.ne.s32.totalorder %s45, %s46
    %p58 = scmp.eq.s32.totalorder %s15, 1
    %p59 = por %p57, %p58
    %p61 = scmp.ne.s32.totalorder %s46, %s60
    %p62 = scmp.eq.s32.totalorder %s15, 0
    %p63 = por %p61, %p62
    %s65 = sadd.s32 %s64, 1
    %p68 = scmp.eq.s32.totalorder %s9, 1
    %p69 = scmp.ne.s32.totalorder %s64, %s66
    %p70 = scmp.eq.s32.totalorder %s9, 0
    %p71 = por %p69, %p70
    %p72 = scmp.ne.s32.totalorder %s64, %s66
    %p73 = scmp.eq.s32.totalorder %s14, 1
    %p74 = por %p72, %p73
    %p75 = scmp.ne.s32.totalorder %s66, %s67
    %p76 = scmp.eq.s32.totalorder %s14, 0
    %p77 = por %p75, %p76
    %p78 = scmp.ne.s32.totalorder %s66, %s67
    %p79 = scmp.eq.s32.totalorder %s15, 1
    %p80 = por %p78, %p79
    %p82 = scmp.ne.s32.totalorder %s67, %s81
    %p83 = scmp.eq.s32.totalorder %s15, 0
    %p84 = por %p82, %p83
    %s85 = ssub.s32 %s9, %s16
    %p86 = scmp.eq.s32.totalorder %s85, 0
    %s88 = sadd.s32 %s87, 1
    %s89 = scalar_select %p86, %s87, %s88
    %p92 = pneg %p86
    %p93 = scmp.eq.s32.totalorder %s9, 1
    %p94 = por %p92, %p93
    %p95 = scmp.ne.s32.totalorder %s87, %s90
    %p96 = scmp.eq.s32.totalorder %s9, 0
    %p97 = por %p95, %p96
    %p98 = scmp.ne.s32.totalorder %s87, %s90
    %p99 = scmp.eq.s32.totalorder %s14, 1
    %p100 = por %p98, %p99
    %p101 = scmp.ne.s32.totalorder %s90, %s91
    %p102 = scmp.eq.s32.totalorder %s14, 0
    %p103 = por %p101, %p102
    %p104 = scmp.ne.s32.totalorder %s90, %s91
    %p105 = scmp.eq.s32.totalorder %s15, 1
    %p106 = por %p104, %p105
    %p108 = scmp.ne.s32.totalorder %s91, %s107
    %p109 = scmp.eq.s32.totalorder %s15, 0
    %p110 = por %p108, %p109
    %p111 = scmp.le.s32.totalorder 1, %s9
    %p112 = scmp.lt.s32.totalorder %s9, 3
    %p113 = pnand %p111, %p112
    %p114 = pneg %p113
    // Predicated region
    $region9: #{residual_block_forward.2} parent=5 // pred_check
      _
    $region10: #{residual_block_forward.2} parent=5 // pred_check_branch
      %116 = sbr.rel (%p113) target = $region12
    $region11: #{residual_block_forward.2} parent=5 // pred_region
      %s117 = ssub.s32 %s9, 1
      // Predicated region
      $region13: #{residual_block_forward.2} parent=11 // pred_check
        %p118 = pneg %p56
      $region14: #{residual_block_forward.2} parent=11 // pred_check_branch
        %120 = sbr.rel (%p118) target = $region16
      $region15: #{residual_block_forward.2} parent=11 // pred_region
        _
      $region16: #{residual_block_forward.2} parent=11 // pred_fallthru
        _
      // Predicated region
      $region17: #{residual_block_forward.2} parent=11 // pred_check
        %p121 = pneg %p77
      $region18: #{residual_block_forward.2} parent=11 // pred_check_branch
        %123 = sbr.rel (%p121) target = $region20
      $region19: #{residual_block_forward.2} parent=11 // pred_region
        _
      $region20: #{residual_block_forward.2} parent=11 // pred_fallthru
        _
    $region12: #{residual_block_forward.2} parent=5 // pred_fallthru
      _
    %p124 = scmp.lt.s32.totalorder %s9, 2
    // Predicated region
    $region21: #{residual_block_forward.2} parent=5 // pred_check
      %p125 = pneg %p124
    $region22: #{residual_block_forward.2} parent=5 // pred_check_branch
      %127 = sbr.rel (%p125) target = $region24
    $region23: #{residual_block_forward.2} parent=5 // pred_region
      // Predicated region
      $region25: #{residual_block_forward.2} parent=23 // pred_check
        %p128 = pneg %p29
      $region26: #{residual_block_forward.2} parent=23 // pred_check_branch
        %130 = sbr.rel (%p128) target = $region28
      $region27: #{residual_block_forward.2} parent=23 // pred_region
        %s131 = smul.u32 32, %s9
        %p132 = scmp.lt.s32.totalorder %s131, 63
        %s133 = scalar_select %p132, %s131, 63
        %s134 = smul.addr %s133, 4
        %s135 = scalar_lea.vmem %s0, %s134
        %s136 = smul.u32 32, %s9
      $region28: #{residual_block_forward.2} parent=23 // pred_fallthru
        _
    $region24: #{residual_block_forward.2} parent=5 // pred_fallthru
      _
    %p137 = scmp.le.s32.totalorder 1, %s9
    %p138 = scmp.lt.s32.totalorder %s9, 3
    %p139 = pnand %p137, %p138
    %p140 = pneg %p139
    // Predicated region
    $region29: #{residual_block_forward.2} parent=5 // pred_check
      _
    $region30: #{residual_block_forward.2} parent=5 // pred_check_branch
      %142 = sbr.rel (%p139) target = $region32
    $region31: #{residual_block_forward.2} parent=5 // pred_region
      %s143 = ssub.s32 %s9, 1
      %s144 = smul.u32 32, %s14
      %p145 = scmp.lt.s32.totalorder %s144, 63
      %s146 = scalar_select %p145, %s144, 63
      %s147 = smul.addr %s146, 4
      %s148 = scalar_lea.vmem %s0, %s147
      %p149 = pneg %p35
      %p150 = pneg %p32
      %p151 = pneg %p56
      %p152 = pneg %p53
      %p153 = pneg %p77
      %p154 = pneg %p74
      %p155 = pneg %p103
      %p156 = pneg %p100
      %s157 = smul.u32 32, %s14
      %p158 = scmp.lt.s32.totalorder %s157, 63
      %s159 = scalar_select %p158, %s157, 63
      %s160 = smul.addr %s159, 4
      %s161 = scalar_lea.vmem %s3, %s160
      %s162 = smul.u32 32, %s14
      %p163 = scmp.lt.s32.totalorder %s162, 63
      %s164 = scalar_select %p163, %s162, 63
      %s165 = smul.addr %s164, 4
      %s166 = scalar_lea.vmem %s0, %s165
      %s167 = smul.u32 32, %s14
      %s168 = smul.u32 32, %s14
      %p169 = scmp.lt.s32.totalorder %s168, 63
      %s170 = scalar_select %p169, %s168, 63
      %s171 = smul.addr %s170, 4
      %s172 = scalar_lea.vmem %s3, %s171
      %s173 = smul.u32 32, %s14
      %v175 = vld [vmem:[%s166] sm:$0xf]
      %v176 = vld [vmem:[%s166 + $0x4] sm:$0xf]
      %v177 = vld [vmem:[%s166 + $0x8] sm:$0xf]
      %v178 = vld [vmem:[%s166 + $0xc] sm:$0xf]
      %v179 = vld [vmem:[%s166 + $0x10] sm:$0xf]
      %v180 = vld [vmem:[%s166 + $0x14] sm:$0xf]
      %v181 = vld [vmem:[%s166 + $0x18] sm:$0xf]
      %v182 = vld [vmem:[%s166 + $0x1c] sm:$0xf]
      %v183 = vld [vmem:[%s166 + $0x20] sm:$0xf]
      %v184 = vld [vmem:[%s166 + $0x24] sm:$0xf]
      %v185 = vld [vmem:[%s166 + $0x28] sm:$0xf]
      %v186 = vld [vmem:[%s166 + $0x2c] sm:$0xf]
      %v187 = vld [vmem:[%s166 + $0x30] sm:$0xf]
      %v188 = vld [vmem:[%s166 + $0x34] sm:$0xf]
      %v189 = vld [vmem:[%s166 + $0x38] sm:$0xf]
      %v190 = vld [vmem:[%s166 + $0x3c] sm:$0xf]
      %v191 = vld [vmem:[%s166 + $0x40] sm:$0xf]
      %v192 = vld [vmem:[%s166 + $0x44] sm:$0xf]
      %v193 = vld [vmem:[%s166 + $0x48] sm:$0xf]
      %v194 = vld [vmem:[%s166 + $0x4c] sm:$0xf]
      %v195 = vld [vmem:[%s166 + $0x50] sm:$0xf]
      %v196 = vld [vmem:[%s166 + $0x54] sm:$0xf]
      %v197 = vld [vmem:[%s166 + $0x58] sm:$0xf]
      %v198 = vld [vmem:[%s166 + $0x5c] sm:$0xf]
      %v199 = vld [vmem:[%s166 + $0x60] sm:$0xf]
      %v200 = vld [vmem:[%s166 + $0x64] sm:$0xf]
      %v201 = vld [vmem:[%s166 + $0x68] sm:$0xf]
      %v202 = vld [vmem:[%s166 + $0x6c] sm:$0xf]
      %v203 = vld [vmem:[%s166 + $0x70] sm:$0xf]
      %v204 = vld [vmem:[%s166 + $0x74] sm:$0xf]
      %v205 = vld [vmem:[%s166 + $0x78] sm:$0xf]
      %v206 = vld [vmem:[%s166 + $0x7c] sm:$0xf]
      %v207 = vld [vmem:[%s1] sm:$0xf]
      %v208 = vld [vmem:[%s1 + $0x4] sm:$0xf]
      %v209 = vld [vmem:[%s1 + $0x8] sm:$0xf]
      %v210 = vld [vmem:[%s1 + $0xc] sm:$0xf]
      %v211 = vld [vmem:[%s1 + $0x10] sm:$0xf]
      %v212 = vld [vmem:[%s1 + $0x14] sm:$0xf]
      %v213 = vld [vmem:[%s1 + $0x18] sm:$0xf]
      %v214 = vld [vmem:[%s1 + $0x1c] sm:$0xf]
      %v215 = vld [vmem:[%s1 + $0x20] sm:$0xf]
      %v216 = vld [vmem:[%s1 + $0x24] sm:$0xf]
      %v217 = vld [vmem:[%s1 + $0x28] sm:$0xf]
      %v218 = vld [vmem:[%s1 + $0x2c] sm:$0xf]
      %v219 = vld [vmem:[%s1 + $0x30] sm:$0xf]
      %v220 = vld [vmem:[%s1 + $0x34] sm:$0xf]
      %v221 = vld [vmem:[%s1 + $0x38] sm:$0xf]
      %v222 = vld [vmem:[%s1 + $0x3c] sm:$0xf]
      %v223 = vld [vmem:[%s2] sm:$0x1]
      %v225 = vlaneseq
      %v226 = vshrl.u32 %v225, 7
      %v227 = vsub.s32 0, %v226
      %v228 = vrot.slane %v223, %v227
      %v262 = vunpack.c.l.b16 %v175
      %v263 = vunpack.c.l.b16 %v176
      %v264 = vunpack.c.l.b16 %v177
      %v265 = vunpack.c.l.b16 %v178
      %v266 = vunpack.c.l.b16 %v179
      %v267 = vunpack.c.l.b16 %v180
      %v268 = vunpack.c.l.b16 %v181
      %v269 = vunpack.c.l.b16 %v182
      %v270 = vunpack.c.l.b16 %v183
      %v271 = vunpack.c.l.b16 %v184
      %v272 = vunpack.c.l.b16 %v185
      %v273 = vunpack.c.l.b16 %v186
      %v274 = vunpack.c.l.b16 %v187
      %v275 = vunpack.c.l.b16 %v188
      %v276 = vunpack.c.l.b16 %v189
      %v277 = vunpack.c.l.b16 %v190
      %v278 = vunpack.c.l.b16 %v191
      %v279 = vunpack.c.l.b16 %v192
      %v280 = vunpack.c.l.b16 %v193
      %v281 = vunpack.c.l.b16 %v194
      %v282 = vunpack.c.l.b16 %v195
      %v283 = vunpack.c.l.b16 %v196
      %v284 = vunpack.c.l.b16 %v197
      %v285 = vunpack.c.l.b16 %v198
      %v286 = vunpack.c.l.b16 %v199
      %v287 = vunpack.c.l.b16 %v200
      %v288 = vunpack.c.l.b16 %v201
      %v289 = vunpack.c.l.b16 %v202
      %v290 = vunpack.c.l.b16 %v203
      %v291 = vunpack.c.l.b16 %v204
      %v292 = vunpack.c.l.b16 %v205
      %v293 = vunpack.c.l.b16 %v206
      %v294 = vpack.c.b16 %v263, %v262
      %v295 = vpack.c.b16 %v265, %v264
      %v296 = vpack.c.b16 %v267, %v266
      %v297 = vpack.c.b16 %v269, %v268
      %v298 = vpack.c.b16 %v271, %v270
      %v299 = vpack.c.b16 %v273, %v272
      %v300 = vpack.c.b16 %v275, %v274
      %v301 = vpack.c.b16 %v277, %v276
      %v302 = vpack.c.b16 %v279, %v278
      %v303 = vpack.c.b16 %v281, %v280
      %v304 = vpack.c.b16 %v283, %v282
      %v305 = vpack.c.b16 %v285, %v284
      %v306 = vpack.c.b16 %v287, %v286
      %v307 = vpack.c.b16 %v289, %v288
      %v308 = vpack.c.b16 %v291, %v290
      %v309 = vpack.c.b16 %v293, %v292
      %v342 = vunpack.c.l.b16 %v207
      %v343 = vunpack.c.l.b16 %v208
      %v344 = vunpack.c.l.b16 %v209
      %v345 = vunpack.c.l.b16 %v210
      %v346 = vunpack.c.l.b16 %v211
      %v347 = vunpack.c.l.b16 %v212
      %v348 = vunpack.c.l.b16 %v213
      %v349 = vunpack.c.l.b16 %v214
      %v350 = vunpack.c.l.b16 %v215
      %v351 = vunpack.c.l.b16 %v216
      %v352 = vunpack.c.l.b16 %v217
      %v353 = vunpack.c.l.b16 %v218
      %v354 = vunpack.c.l.b16 %v219
      %v355 = vunpack.c.l.b16 %v220
      %v356 = vunpack.c.l.b16 %v221
      %v357 = vunpack.c.l.b16 %v222
      %v358 = vpack.c.b16 %v343, %v342
      %v359 = vpack.c.b16 %v345, %v344
      %v360 = vpack.c.b16 %v347, %v346
      %v361 = vpack.c.b16 %v349, %v348
      %v362 = vpack.c.b16 %v351, %v350
      %v363 = vpack.c.b16 %v353, %v352
      %v364 = vpack.c.b16 %v355, %v354
      %v365 = vpack.c.b16 %v357, %v356
      %374 = vmatprep.subr.bf16.mxu0 0
      %375 = vmatpush1.bf16.msra.mxu0 %v358
      %376 = vmatprep.subr.bf16.mxu0 0
      %377 = vmatpush1.bf16.msra.mxu0 %v359
      %378 = vmatprep.subr.bf16.mxu0 0
      %379 = vmatpush1.bf16.msra.mxu0 %v360
      %380 = vmatprep.subr.bf16.mxu0 0
      %381 = vmatpush1.bf16.msra.mxu0 %v361
      %382 = vmatprep.subr.bf16.mxu0 0
      %383 = vmatpush1.bf16.msra.mxu0 %v362
      %384 = vmatprep.subr.bf16.mxu0 0
      %385 = vmatpush1.bf16.msra.mxu0 %v363
      %386 = vmatprep.subr.bf16.mxu0 0
      %387 = vmatpush1.bf16.msra.mxu0 %v364
      %388 = vmatprep.subr.bf16.mxu0 0
      %389 = vmatpush1.bf16.msra.mxu0 %v365
      %390 = vmatprep.subr.bf16.mxu0 0
      %391 = vmatpush1.bf16.msra.mxu0 0
      %392 = vmatprep.subr.bf16.mxu0 0
      %393 = vmatpush1.bf16.msra.mxu0 0
      %394 = vmatprep.subr.bf16.mxu0 0
      %395 = vmatpush1.bf16.msra.mxu0 0
      %396 = vmatprep.subr.bf16.mxu0 0
      %397 = vmatpush1.bf16.msra.mxu0 0
      %398 = vmatprep.subr.bf16.mxu0 0
      %399 = vmatpush1.bf16.msra.mxu0 0
      %400 = vmatprep.subr.bf16.mxu0 0
      %401 = vmatpush1.bf16.msra.mxu0 0
      %402 = vmatprep.subr.bf16.mxu0 0
      %403 = vmatpush1.bf16.msra.mxu0 0
      %404 = vmatprep.subr.bf16.mxu0 0
      %405 = vmatpush1.bf16.msra.mxu0 0
      %406 = vmatprep.mubr.bf16.mxu0 0
      %407 = vmatmul.mubr.bf16.gmra.mrb[0].mxu0 %v294
      %v408 = vpop.f32.mrb[0].mxu0
      %v409 = vadd.f32 %v228, %v408
      %v410 = vpop.f32.mrb[0].mxu0
      %v411 = vpop.f32.mrb[0].mxu0
      %v412 = vadd.f32 %v228, %v411
      %v413 = vpop.f32.mrb[0].mxu0
      %414 = vmatprep.mubr.bf16.mxu0 0
      %415 = vmatmul.mubr.bf16.gmra.mrb[0].mxu0 %v295
      %v416 = vpop.f32.mrb[0].mxu0
      %v417 = vadd.f32 %v228, %v416
      %v418 = vpop.f32.mrb[0].mxu0
      %v419 = vpop.f32.mrb[0].mxu0
      %v420 = vadd.f32 %v228, %v419
      %v421 = vpop.f32.mrb[0].mxu0
      %422 = vmatprep.mubr.bf16.mxu0 0
      %423 = vmatmul.mubr.bf16.gmra.mrb[0].mxu0 %v296
      %v424 = vpop.f32.mrb[0].mxu0
      %v425 = vadd.f32 %v228, %v424
      %v426 = vpop.f32.mrb[0].mxu0
      %v427 = vpop.f32.mrb[0].mxu0
      %v428 = vadd.f32 %v228, %v427
      %v429 = vpop.f32.mrb[0].mxu0
      %430 = vmatprep.mubr.bf16.mxu0 0
      %431 = vmatmul.mubr.bf16.gmra.mrb[0].mxu0 %v297
      %v432 = vpop.f32.mrb[0].mxu0
      %v433 = vadd.f32 %v228, %v432
      %v434 = vpop.f32.mrb[0].mxu0
      %v435 = vpop.f32.mrb[0].mxu0
      %v436 = vadd.f32 %v228, %v435
      %v437 = vpop.f32.mrb[0].mxu0
      %438 = vmatprep.mubr.bf16.mxu0 0
      %439 = vmatmul.mubr.bf16.gmra.mrb[0].mxu0 %v298
      %v440 = vpop.f32.mrb[0].mxu0
      %v441 = vadd.f32 %v228, %v440
      %v442 = vpop.f32.mrb[0].mxu0
      %v443 = vpop.f32.mrb[0].mxu0
      %v444 = vadd.f32 %v228, %v443
      %v445 = vpop.f32.mrb[0].mxu0
      %446 = vmatprep.mubr.bf16.mxu0 0
      %447 = vmatmul.mubr.bf16.gmra.mrb[0].mxu0 %v299
      %v448 = vpop.f32.mrb[0].mxu0
      %v449 = vadd.f32 %v228, %v448
      %v450 = vpop.f32.mrb[0].mxu0
      %v451 = vpop.f32.mrb[0].mxu0
      %v452 = vadd.f32 %v228, %v451
      %v453 = vpop.f32.mrb[0].mxu0
      %454 = vmatprep.mubr.bf16.mxu0 0
      %455 = vmatmul.mubr.bf16.gmra.mrb[0].mxu0 %v300
      %v456 = vpop.f32.mrb[0].mxu0
      %v457 = vadd.f32 %v228, %v456
      %v458 = vpop.f32.mrb[0].mxu0
      %v459 = vpop.f32.mrb[0].mxu0
      %v460 = vadd.f32 %v228, %v459
      %v461 = vpop.f32.mrb[0].mxu0
      %462 = vmatprep.mubr.bf16.mxu0 0
      %463 = vmatmul.mubr.bf16.gmra.mrb[0].mxu0 %v301
      %v464 = vpop.f32.mrb[0].mxu0
      %v465 = vadd.f32 %v228, %v464
      %v466 = vpop.f32.mrb[0].mxu0
      %v467 = vpop.f32.mrb[0].mxu0
      %v468 = vadd.f32 %v228, %v467
      %v469 = vpop.f32.mrb[0].mxu0
      %470 = vmatprep.mubr.bf16.mxu0 0
      %471 = vmatmul.mubr.bf16.gmra.mrb[0].mxu0 %v302
      %v472 = vpop.f32.mrb[0].mxu0
      %v473 = vadd.f32 %v228, %v472
      %v474 = vpop.f32.mrb[0].mxu0
      %v475 = vpop.f32.mrb[0].mxu0
      %v476 = vadd.f32 %v228, %v475
      %v477 = vpop.f32.mrb[0].mxu0
      %478 = vmatprep.mubr.bf16.mxu0 0
      %479 = vmatmul.mubr.bf16.gmra.mrb[0].mxu0 %v303
      %v480 = vpop.f32.mrb[0].mxu0
      %v481 = vadd.f32 %v228, %v480
      %v482 = vpop.f32.mrb[0].mxu0
      %v483 = vpop.f32.mrb[0].mxu0
      %v484 = vadd.f32 %v228, %v483
      %v485 = vpop.f32.mrb[0].mxu0
      %486 = vmatprep.mubr.bf16.mxu0 0
      %487 = vmatmul.mubr.bf16.gmra.mrb[0].mxu0 %v304
      %v488 = vpop.f32.mrb[0].mxu0
      %v489 = vadd.f32 %v228, %v488
      %v490 = vpop.f32.mrb[0].mxu0
      %v491 = vpop.f32.mrb[0].mxu0
      %v492 = vadd.f32 %v228, %v491
      %v493 = vpop.f32.mrb[0].mxu0
      %494 = vmatprep.mubr.bf16.mxu0 0
      %495 = vmatmul.mubr.bf16.gmra.mrb[0].mxu0 %v305
      %v496 = vpop.f32.mrb[0].mxu0
      %v497 = vadd.f32 %v228, %v496
      %v498 = vpop.f32.mrb[0].mxu0
      %v499 = vpop.f32.mrb[0].mxu0
      %v500 = vadd.f32 %v228, %v499
      %v501 = vpop.f32.mrb[0].mxu0
      %502 = vmatprep.mubr.bf16.mxu0 0
      %503 = vmatmul.mubr.bf16.gmra.mrb[0].mxu0 %v306
      %v504 = vpop.f32.mrb[0].mxu0
      %v505 = vadd.f32 %v228, %v504
      %v506 = vpop.f32.mrb[0].mxu0
      %v507 = vpop.f32.mrb[0].mxu0
      %v508 = vadd.f32 %v228, %v507
      %v509 = vpop.f32.mrb[0].mxu0
      %510 = vmatprep.mubr.bf16.mxu0 0
      %511 = vmatmul.mubr.bf16.gmra.mrb[0].mxu0 %v307
      %v512 = vpop.f32.mrb[0].mxu0
      %v513 = vadd.f32 %v228, %v512
      %v514 = vpop.f32.mrb[0].mxu0
      %v515 = vpop.f32.mrb[0].mxu0
      %v516 = vadd.f32 %v228, %v515
      %v517 = vpop.f32.mrb[0].mxu0
      %518 = vmatprep.mubr.bf16.mxu0 0
      %519 = vmatmul.mubr.bf16.gmra.mrb[0].mxu0 %v308
      %v520 = vpop.f32.mrb[0].mxu0
      %v521 = vadd.f32 %v228, %v520
      %v522 = vpop.f32.mrb[0].mxu0
      %v523 = vpop.f32.mrb[0].mxu0
      %v524 = vadd.f32 %v228, %v523
      %v525 = vpop.f32.mrb[0].mxu0
      %526 = vmatprep.mubr.bf16.mxu0 0
      %527 = vmatmul.mubr.bf16.gmra.mrb[0].mxu0 %v309
      %v528 = vpop.f32.mrb[0].mxu0
      %v529 = vadd.f32 %v228, %v528
      %v530 = vpop.f32.mrb[0].mxu0
      %v531 = vpop.f32.mrb[0].mxu0
      %v532 = vadd.f32 %v228, %v531
      %v533 = vpop.f32.mrb[0].mxu0
      %534 = vdwg.mxu0
      %v535 = vpack.c.bf16 %v412, %v409
      %v536 = vpack.c.bf16 %v420, %v417
      %v537 = vpack.c.bf16 %v428, %v425
      %v538 = vpack.c.bf16 %v436, %v433
      %v539 = vpack.c.bf16 %v444, %v441
      %v540 = vpack.c.bf16 %v452, %v449
      %v541 = vpack.c.bf16 %v460, %v457
      %v542 = vpack.c.bf16 %v468, %v465
      %v543 = vpack.c.bf16 %v476, %v473
      %v544 = vpack.c.bf16 %v484, %v481
      %v545 = vpack.c.bf16 %v492, %v489
      %v546 = vpack.c.bf16 %v500, %v497
      %v547 = vpack.c.bf16 %v508, %v505
      %v548 = vpack.c.bf16 %v516, %v513
      %v549 = vpack.c.bf16 %v524, %v521
      %v550 = vpack.c.bf16 %v532, %v529
      %v567 = vunpack.c.l.b16 %v535
      %v568 = vunpack.c.h.b16 %v535
      %v569 = vunpack.c.l.b16 %v536
      %v570 = vunpack.c.h.b16 %v536
      %v571 = vunpack.c.l.b16 %v537
      %v572 = vunpack.c.h.b16 %v537
      %v573 = vunpack.c.l.b16 %v538
      %v574 = vunpack.c.h.b16 %v538
      %v575 = vunpack.c.l.b16 %v539
      %v576 = vunpack.c.h.b16 %v539
      %v577 = vunpack.c.l.b16 %v540
      %v578 = vunpack.c.h.b16 %v540
      %v579 = vunpack.c.l.b16 %v541
      %v580 = vunpack.c.h.b16 %v541
      %v581 = vunpack.c.l.b16 %v542
      %v582 = vunpack.c.h.b16 %v542
      %v583 = vunpack.c.l.b16 %v543
      %v584 = vunpack.c.h.b16 %v543
      %v585 = vunpack.c.l.b16 %v544
      %v586 = vunpack.c.h.b16 %v544
      %v587 = vunpack.c.l.b16 %v545
      %v588 = vunpack.c.h.b16 %v545
      %v589 = vunpack.c.l.b16 %v546
      %v590 = vunpack.c.h.b16 %v546
      %v591 = vunpack.c.l.b16 %v547
      %v592 = vunpack.c.h.b16 %v547
      %v593 = vunpack.c.l.b16 %v548
      %v594 = vunpack.c.h.b16 %v548
      %v595 = vunpack.c.l.b16 %v549
      %v596 = vunpack.c.h.b16 %v549
      %v597 = vunpack.c.l.b16 %v550
      %v598 = vunpack.c.h.b16 %v550
      %v599 = vpack.c.b16 %v567, %v567
      %v600 = vpack.c.b16 %v568, %v568
      %v601 = vpack.c.b16 %v569, %v569
      %v602 = vpack.c.b16 %v570, %v570
      %v603 = vpack.c.b16 %v571, %v571
      %v604 = vpack.c.b16 %v572, %v572
      %v605 = vpack.c.b16 %v573, %v573
      %v606 = vpack.c.b16 %v574, %v574
      %v607 = vpack.c.b16 %v575, %v575
      %v608 = vpack.c.b16 %v576, %v576
      %v609 = vpack.c.b16 %v577, %v577
      %v610 = vpack.c.b16 %v578, %v578
      %v611 = vpack.c.b16 %v579, %v579
      %v612 = vpack.c.b16 %v580, %v580
      %v613 = vpack.c.b16 %v581, %v581
      %v614 = vpack.c.b16 %v582, %v582
      %v615 = vpack.c.b16 %v583, %v583
      %v616 = vpack.c.b16 %v584, %v584
      %v617 = vpack.c.b16 %v585, %v585
      %v618 = vpack.c.b16 %v586, %v586
      %v619 = vpack.c.b16 %v587, %v587
      %v620 = vpack.c.b16 %v588, %v588
      %v621 = vpack.c.b16 %v589, %v589
      %v622 = vpack.c.b16 %v590, %v590
      %v623 = vpack.c.b16 %v591, %v591
      %v624 = vpack.c.b16 %v592, %v592
      %v625 = vpack.c.b16 %v593, %v593
      %v626 = vpack.c.b16 %v594, %v594
      %v627 = vpack.c.b16 %v595, %v595
      %v628 = vpack.c.b16 %v596, %v596
      %v629 = vpack.c.b16 %v597, %v597
      %v630 = vpack.c.b16 %v598, %v598
      %663 = vst [vmem:[%s172] sm:$0xf] %v599
      %664 = vst [vmem:[%s172 + $0x4] sm:$0xf] %v600
      %665 = vst [vmem:[%s172 + $0x8] sm:$0xf] %v601
      %666 = vst [vmem:[%s172 + $0xc] sm:$0xf] %v602
      %667 = vst [vmem:[%s172 + $0x10] sm:$0xf] %v603
      %668 = vst [vmem:[%s172 + $0x14] sm:$0xf] %v604
      %669 = vst [vmem:[%s172 + $0x18] sm:$0xf] %v605
      %670 = vst [vmem:[%s172 + $0x1c] sm:$0xf] %v606
      %671 = vst [vmem:[%s172 + $0x20] sm:$0xf] %v607
      %672 = vst [vmem:[%s172 + $0x24] sm:$0xf] %v608
      %673 = vst [vmem:[%s172 + $0x28] sm:$0xf] %v609
      %674 = vst [vmem:[%s172 + $0x2c] sm:$0xf] %v610
      %675 = vst [vmem:[%s172 + $0x30] sm:$0xf] %v611
      %676 = vst [vmem:[%s172 + $0x34] sm:$0xf] %v612
      %677 = vst [vmem:[%s172 + $0x38] sm:$0xf] %v613
      %678 = vst [vmem:[%s172 + $0x3c] sm:$0xf] %v614
      %679 = vst [vmem:[%s172 + $0x40] sm:$0xf] %v615
      %680 = vst [vmem:[%s172 + $0x44] sm:$0xf] %v616
      %681 = vst [vmem:[%s172 + $0x48] sm:$0xf] %v617
      %682 = vst [vmem:[%s172 + $0x4c] sm:$0xf] %v618
      %683 = vst [vmem:[%s172 + $0x50] sm:$0xf] %v619
      %684 = vst [vmem:[%s172 + $0x54] sm:$0xf] %v620
      %685 = vst [vmem:[%s172 + $0x58] sm:$0xf] %v621
      %686 = vst [vmem:[%s172 + $0x5c] sm:$0xf] %v622
      %687 = vst [vmem:[%s172 + $0x60] sm:$0xf] %v623
      %688 = vst [vmem:[%s172 + $0x64] sm:$0xf] %v624
      %689 = vst [vmem:[%s172 + $0x68] sm:$0xf] %v625
      %690 = vst [vmem:[%s172 + $0x6c] sm:$0xf] %v626
      %691 = vst [vmem:[%s172 + $0x70] sm:$0xf] %v627
      %692 = vst [vmem:[%s172 + $0x74] sm:$0xf] %v628
      %693 = vst [vmem:[%s172 + $0x78] sm:$0xf] %v629
      %694 = vst [vmem:[%s172 + $0x7c] sm:$0xf] %v630
      %s695 = smul.u32 32, %s14
      %p696 = scmp.lt.s32.totalorder %s695, 63
      %s697 = scalar_select %p696, %s695, 63
      %s698 = smul.addr %s697, 4
      %s699 = scalar_lea.vmem %s3, %s698
      // Predicated region
      $region33: #{residual_block_forward.2} parent=31 // pred_check
        %p700 = pneg %p100
      $region34: #{residual_block_forward.2} parent=31 // pred_check_branch
        %702 = sbr.rel (%p700) target = $region36
      $region35: #{residual_block_forward.2} parent=31 // pred_region
        %s703 = smul.u32 32, %s14
      $region36: #{residual_block_forward.2} parent=31 // pred_fallthru
        _
    $region32: #{residual_block_forward.2} parent=5 // pred_fallthru
      _
    %p704 = scmp.le.s32.totalorder 2, %s9
    // Predicated region
    $region37: #{residual_block_forward.2} parent=5 // pred_check
      %p705 = pneg %p704
    $region38: #{residual_block_forward.2} parent=5 // pred_check_branch
      %707 = sbr.rel (%p705) target = $region40
    $region39: #{residual_block_forward.2} parent=5 // pred_region
      %s708 = ssub.s32 %s9, 2
      // Predicated region
      $region41: #{residual_block_forward.2} parent=39 // pred_check
        %p709 = pneg %p106
      $region42: #{residual_block_forward.2} parent=39 // pred_check_branch
        %711 = sbr.rel (%p709) target = $region44
      $region43: #{residual_block_forward.2} parent=39 // pred_region
        %s712 = smul.u32 32, %s15
        %p713 = scmp.lt.s32.totalorder %s712, 63
        %s714 = scalar_select %p713, %s712, 63
        %s715 = smul.addr %s714, 4
        %s716 = scalar_lea.vmem %s3, %s715
      $region44: #{residual_block_forward.2} parent=39 // pred_fallthru
        _
    $region40: #{residual_block_forward.2} parent=5 // pred_fallthru
      _
  $region6: #{residual_block_forward.2} parent=0 // loop_footer
    %s13 = sadd.s32 1, %s9
  $region7: #{residual_block_forward.2} parent=0 // loop_footer_branch
    %8 = sbr.rel target = $region3
  $region8: #{residual_block_forward.2} parent=0 // loop_exit
    _

// kernel: residual_block_forward.3
$region0: #{residual_block_forward.3}
  #allocation0 [shape = 'u32[]', space=smem, size = 0x4, offset = 0x4, fixed_abs, tag = 'smem constant byte address 0x4 - core index']
  #allocation1 [shape = 'u32[144,128]{1,0:T(1,128)}', space=vmem, size = 0x12000, scoped, tag = 'internal scratch']
  %s0 = inlined_call_operand.vmem [shape: bf16[2,36,16,128], index: 0, kind: input, shape index: {}]
  %s1 = inlined_call_operand.vmem [shape: bf16[3,384,128], index: 1, kind: input, shape index: {}]
  %s2 = inlined_call_operand.vmem [shape: f32[1,128], index: 2, kind: input, shape index: {}]
  %s3 = inlined_call_operand.vmem [shape: bf16[128,128], index: 3, kind: input, shape index: {}]
  %s4 = inlined_call_operand.vmem [shape: f32[1,128], index: 4, kind: input, shape index: {}]
  %s5 = inlined_call_operand.vmem [shape: bf16[2,8,8,128], index: 5, kind: input, shape index: {}]
  %s6 = inlined_call_operand.vmem [shape: bf16[128,128], index: 6, kind: input, shape index: {}]
  %s7 = inlined_call_operand.vmem [shape: f32[1,128], index: 7, kind: input, shape index: {}]
  %s8 = inlined_call_operand.vmem [shape: bf16[2,8,8,128], index: 8, kind: output, shape index: {}]
  %s9 = sld [smem:[#allocation0]]
  $region65: #{residual_block_forward.3} parent=0
    _
  %s11 = ssub.s32 1, %s9
  %s12 = scalar_select 0, %s11, %s9
  loop: start=0, step=1, limit=4
  $region2: #{residual_block_forward.3} parent=0 // loop_pre_header
    _
  $region3: #{residual_block_forward.3} parent=0 // loop_header
    %s14 = sphi 0, %s18
    %p15 = scmp.ge.s32.totalorder %s14, 4
    %s24 = sphi 0, %s26
    %s27 = sphi 0, %s24
    %s28 = sphi 0, %s27
    %s44 = sphi 0, %s28
    %s48 = sphi 0, %s48
    %s50 = sphi 0, %s48
    %s51 = sphi 0, %s50
    %s65 = sphi 0, %s51
    %s69 = sphi 0, %s69
    %s71 = sphi 0, %s69
    %s72 = sphi 0, %s71
    %s86 = sphi 0, %s72
    %s90 = sphi 0, %s90
    %s92 = sphi 0, %s90
    %s93 = sphi 0, %s92
    %s107 = sphi 0, %s93
    %s111 = sphi 0, %s111
    %s113 = sphi 0, %s111
    %s114 = sphi 0, %s113
    %s128 = sphi 0, %s114
    %s134 = sphi 0, %s136
    %s137 = sphi 0, %s134
    %s138 = sphi 0, %s137
    %s154 = sphi 0, %s138
    %s158 = sphi 0, %s158
    %s160 = sphi 0, %s158
    %s161 = sphi 0, %s160
    %s175 = sphi 0, %s161
    %s179 = sphi 0, %s179
    %s181 = sphi 0, %s179
    %s182 = sphi 0, %s181
    %s196 = sphi 0, %s182
    %s202 = sphi 0, %s204
    %s205 = sphi 0, %s202
    %s206 = sphi 0, %s205
    %s222 = sphi 0, %s206
  $region4: #{residual_block_forward.3} parent=0 // loop_header_branch
    %17 = sbr.rel (%p15) target = $region8
  $region5: #{residual_block_forward.3} parent=0 // loop_body
    %s19 = ssub.s32 %s14, 1
    %s20 = ssub.s32 %s14, 2
    %s21 = sadd.s32 %s14, 1
    %s22 = ssub.s32 %s14, %s21
    %p23 = scmp.eq.s32.totalorder %s22, 0
    %s25 = sadd.s32 %s24, 1
    %s26 = scalar_select %p23, %s24, %s25
    %p29 = pneg %p23
    %p30 = scmp.eq.s32.totalorder %s14, 1
    %p31 = por %p29, %p30
    %p32 = scmp.ne.s32.totalorder %s24, %s27
    %p33 = scmp.eq.s32.totalorder %s14, 0
    %p34 = por %p32, %p33
    %p35 = scmp.ne.s32.totalorder %s24, %s27
    %p36 = scmp.eq.s32.totalorder %s19, 1
    %p37 = por %p35, %p36
    %p38 = scmp.ne.s32.totalorder %s27, %s28
    %p39 = scmp.eq.s32.totalorder %s19, 0
    %p40 = por %p38, %p39
    %p41 = scmp.ne.s32.totalorder %s27, %s28
    %p42 = scmp.eq.s32.totalorder %s20, 1
    %p43 = por %p41, %p42
    %p45 = scmp.ne.s32.totalorder %s28, %s44
    %p46 = scmp.eq.s32.totalorder %s20, 0
    %p47 = por %p45, %p46
    %s49 = sadd.s32 %s48, 1
    %p52 = scmp.eq.s32.totalorder %s14, 1
    %p53 = scmp.ne.s32.totalorder %s48, %s50
    %p54 = scmp.eq.s32.totalorder %s14, 0
    %p55 = por %p53, %p54
    %p56 = scmp.ne.s32.totalorder %s48, %s50
    %p57 = scmp.eq.s32.totalorder %s19, 1
    %p58 = por %p56, %p57
    %p59 = scmp.ne.s32.totalorder %s50, %s51
    %p60 = scmp.eq.s32.totalorder %s19, 0
    %p61 = por %p59, %p60
    %p62 = scmp.ne.s32.totalorder %s50, %s51
    %p63 = scmp.eq.s32.totalorder %s20, 1
    %p64 = por %p62, %p63
    %p66 = scmp.ne.s32.totalorder %s51, %s65
    %p67 = scmp.eq.s32.totalorder %s20, 0
    %p68 = por %p66, %p67
    %s70 = sadd.s32 %s69, 1
    %p73 = scmp.eq.s32.totalorder %s14, 1
    %p74 = scmp.ne.s32.totalorder %s69, %s71
    %p75 = scmp.eq.s32.totalorder %s14, 0
    %p76 = por %p74, %p75
    %p77 = scmp.ne.s32.totalorder %s69, %s71
    %p78 = scmp.eq.s32.totalorder %s19, 1
    %p79 = por %p77, %p78
    %p80 = scmp.ne.s32.totalorder %s71, %s72
    %p81 = scmp.eq.s32.totalorder %s19, 0
    %p82 = por %p80, %p81
    %p83 = scmp.ne.s32.totalorder %s71, %s72
    %p84 = scmp.eq.s32.totalorder %s20, 1
    %p85 = por %p83, %p84
    %p87 = scmp.ne.s32.totalorder %s72, %s86
    %p88 = scmp.eq.s32.totalorder %s20, 0
    %p89 = por %p87, %p88
    %s91 = sadd.s32 %s90, 1
    %p94 = scmp.eq.s32.totalorder %s14, 1
    %p95 = scmp.ne.s32.totalorder %s90, %s92
    %p96 = scmp.eq.s32.totalorder %s14, 0
    %p97 = por %p95, %p96
    %p98 = scmp.ne.s32.totalorder %s90, %s92
    %p99 = scmp.eq.s32.totalorder %s19, 1
    %p100 = por %p98, %p99
    %p101 = scmp.ne.s32.totalorder %s92, %s93
    %p102 = scmp.eq.s32.totalorder %s19, 0
    %p103 = por %p101, %p102
    %p104 = scmp.ne.s32.totalorder %s92, %s93
    %p105 = scmp.eq.s32.totalorder %s20, 1
    %p106 = por %p104, %p105
    %p108 = scmp.ne.s32.totalorder %s93, %s107
    %p109 = scmp.eq.s32.totalorder %s20, 0
    %p110 = por %p108, %p109
    %s112 = sadd.s32 %s111, 1
    %p115 = scmp.eq.s32.totalorder %s14, 1
    %p116 = scmp.ne.s32.totalorder %s111, %s113
    %p117 = scmp.eq.s32.totalorder %s14, 0
    %p118 = por %p116, %p117
    %p119 = scmp.ne.s32.totalorder %s111, %s113
    %p120 = scmp.eq.s32.totalorder %s19, 1
    %p121 = por %p119, %p120
    %p122 = scmp.ne.s32.totalorder %s113, %s114
    %p123 = scmp.eq.s32.totalorder %s19, 0
    %p124 = por %p122, %p123
    %p125 = scmp.ne.s32.totalorder %s113, %s114
    %p126 = scmp.eq.s32.totalorder %s20, 1
    %p127 = por %p125, %p126
    %p129 = scmp.ne.s32.totalorder %s114, %s128
    %p130 = scmp.eq.s32.totalorder %s20, 0
    %p131 = por %p129, %p130
    %s132 = ssub.s32 %s14, %s21
    %p133 = scmp.eq.s32.totalorder %s132, 0
    %s135 = sadd.s32 %s134, 1
    %s136 = scalar_select %p133, %s134, %s135
    %p139 = pneg %p133
    %p140 = scmp.eq.s32.totalorder %s14, 1
    %p141 = por %p139, %p140
    %p142 = scmp.ne.s32.totalorder %s134, %s137
    %p143 = scmp.eq.s32.totalorder %s14, 0
    %p144 = por %p142, %p143
    %p145 = scmp.ne.s32.totalorder %s134, %s137
    %p146 = scmp.eq.s32.totalorder %s19, 1
    %p147 = por %p145, %p146
    %p148 = scmp.ne.s32.totalorder %s137, %s138
    %p149 = scmp.eq.s32.totalorder %s19, 0
    %p150 = por %p148, %p149
    %p151 = scmp.ne.s32.totalorder %s137, %s138
    %p152 = scmp.eq.s32.totalorder %s20, 1
    %p153 = por %p151, %p152
    %p155 = scmp.ne.s32.totalorder %s138, %s154
    %p156 = scmp.eq.s32.totalorder %s20, 0
    %p157 = por %p155, %p156
    %s159 = sadd.s32 %s158, 1
    %p162 = scmp.eq.s32.totalorder %s14, 1
    %p163 = scmp.ne.s32.totalorder %s158, %s160
    %p164 = scmp.eq.s32.totalorder %s14, 0
    %p165 = por %p163, %p164
    %p166 = scmp.ne.s32.totalorder %s158, %s160
    %p167 = scmp.eq.s32.totalorder %s19, 1
    %p168 = por %p166, %p167
    %p169 = scmp.ne.s32.totalorder %s160, %s161
    %p170 = scmp.eq.s32.totalorder %s19, 0
    %p171 = por %p169, %p170
    %p172 = scmp.ne.s32.totalorder %s160, %s161
    %p173 = scmp.eq.s32.totalorder %s20, 1
    %p174 = por %p172, %p173
    %p176 = scmp.ne.s32.totalorder %s161, %s175
    %p177 = scmp.eq.s32.totalorder %s20, 0
    %p178 = por %p176, %p177
    %s180 = sadd.s32 %s179, 1
    %p183 = scmp.eq.s32.totalorder %s14, 1
    %p184 = scmp.ne.s32.totalorder %s179, %s181
    %p185 = scmp.eq.s32.totalorder %s14, 0
    %p186 = por %p184, %p185
    %p187 = scmp.ne.s32.totalorder %s179, %s181
    %p188 = scmp.eq.s32.totalorder %s19, 1
    %p189 = por %p187, %p188
    %p190 = scmp.ne.s32.totalorder %s181, %s182
    %p191 = scmp.eq.s32.totalorder %s19, 0
    %p192 = por %p190, %p191
    %p193 = scmp.ne.s32.totalorder %s181, %s182
    %p194 = scmp.eq.s32.totalorder %s20, 1
    %p195 = por %p193, %p194
    %p197 = scmp.ne.s32.totalorder %s182, %s196
    %p198 = scmp.eq.s32.totalorder %s20, 0
    %p199 = por %p197, %p198
    %s200 = ssub.s32 %s14, %s21
    %p201 = scmp.eq.s32.totalorder %s200, 0
    %s203 = sadd.s32 %s202, 1
    %s204 = scalar_select %p201, %s202, %s203
    %p207 = pneg %p201
    %p208 = scmp.eq.s32.totalorder %s14, 1
    %p209 = por %p207, %p208
    %p210 = scmp.ne.s32.totalorder %s202, %s205
    %p211 = scmp.eq.s32.totalorder %s14, 0
    %p212 = por %p210, %p211
    %p213 = scmp.ne.s32.totalorder %s202, %s205
    %p214 = scmp.eq.s32.totalorder %s19, 1
    %p215 = por %p213, %p214
    %p216 = scmp.ne.s32.totalorder %s205, %s206
    %p217 = scmp.eq.s32.totalorder %s19, 0
    %p218 = por %p216, %p217
    %p219 = scmp.ne.s32.totalorder %s205, %s206
    %p220 = scmp.eq.s32.totalorder %s20, 1
    %p221 = por %p219, %p220
    %p223 = scmp.ne.s32.totalorder %s206, %s222
    %p224 = scmp.eq.s32.totalorder %s20, 0
    %p225 = por %p223, %p224
    %p226 = scmp.le.s32.totalorder 1, %s14
    %p227 = scmp.lt.s32.totalorder %s14, 3
    %p228 = pnand %p226, %p227
    %p229 = pneg %p228
    // Predicated region
    $region9: #{residual_block_forward.3} parent=5 // pred_check
      _
    $region10: #{residual_block_forward.3} parent=5 // pred_check_branch
      %231 = sbr.rel (%p228) target = $region12
    $region11: #{residual_block_forward.3} parent=5 // pred_region
      %s232 = ssub.s32 %s14, 1
      // Predicated region
      $region13: #{residual_block_forward.3} parent=11 // pred_check
        %p233 = pneg %p61
      $region14: #{residual_block_forward.3} parent=11 // pred_check_branch
        %235 = sbr.rel (%p233) target = $region16
      $region15: #{residual_block_forward.3} parent=11 // pred_region
        _
      $region16: #{residual_block_forward.3} parent=11 // pred_fallthru
        _
      // Predicated region
      $region17: #{residual_block_forward.3} parent=11 // pred_check
        %p236 = pneg %p82
      $region18: #{residual_block_forward.3} parent=11 // pred_check_branch
        %238 = sbr.rel (%p236) target = $region20
      $region19: #{residual_block_forward.3} parent=11 // pred_region
        _
      $region20: #{residual_block_forward.3} parent=11 // pred_fallthru
        _
      // Predicated region
      $region21: #{residual_block_forward.3} parent=11 // pred_check
        %p239 = pneg %p103
      $region22: #{residual_block_forward.3} parent=11 // pred_check_branch
        %241 = sbr.rel (%p239) target = $region24
      $region23: #{residual_block_forward.3} parent=11 // pred_region
        _
      $region24: #{residual_block_forward.3} parent=11 // pred_fallthru
        _
      // Predicated region
      $region25: #{residual_block_forward.3} parent=11 // pred_check
        %p242 = pneg %p124
      $region26: #{residual_block_forward.3} parent=11 // pred_check_branch
        %244 = sbr.rel (%p242) target = $region28
      $region27: #{residual_block_forward.3} parent=11 // pred_region
        _
      $region28: #{residual_block_forward.3} parent=11 // pred_fallthru
        _
      // Predicated region
      $region29: #{residual_block_forward.3} parent=11 // pred_check
        %p245 = pneg %p171
      $region30: #{residual_block_forward.3} parent=11 // pred_check_branch
        %247 = sbr.rel (%p245) target = $region32
      $region31: #{residual_block_forward.3} parent=11 // pred_region
        _
      $region32: #{residual_block_forward.3} parent=11 // pred_fallthru
        _
      // Predicated region
      $region33: #{residual_block_forward.3} parent=11 // pred_check
        %p248 = pneg %p192
      $region34: #{residual_block_forward.3} parent=11 // pred_check_branch
        %250 = sbr.rel (%p248) target = $region36
      $region35: #{residual_block_forward.3} parent=11 // pred_region
        _
      $region36: #{residual_block_forward.3} parent=11 // pred_fallthru
        _
    $region12: #{residual_block_forward.3} parent=5 // pred_fallthru
      _
    %p251 = scmp.lt.s32.totalorder %s14, 2
    // Predicated region
    $region37: #{residual_block_forward.3} parent=5 // pred_check
      %p252 = pneg %p251
    $region38: #{residual_block_forward.3} parent=5 // pred_check_branch
      %254 = sbr.rel (%p252) target = $region40
    $region39: #{residual_block_forward.3} parent=5 // pred_region
      // Predicated region
      $region41: #{residual_block_forward.3} parent=39 // pred_check
        %p255 = pneg %p34
      $region42: #{residual_block_forward.3} parent=39 // pred_check_branch
        %257 = sbr.rel (%p255) target = $region44
      $region43: #{residual_block_forward.3} parent=39 // pred_region
        %p258 = scmp.lt.s32.totalorder %s14, 1
        %s259 = scalar_select %p258, %s14, 1
        %s260 = smul.addr %s259, 72
        %s261 = smul.addr %s260, 4
        %s262 = scalar_lea.vmem %s0, %s261
      $region44: #{residual_block_forward.3} parent=39 // pred_fallthru
        _
      // Predicated region
      $region45: #{residual_block_forward.3} parent=39 // pred_check
        %p263 = pneg %p144
      $region46: #{residual_block_forward.3} parent=39 // pred_check_branch
        %265 = sbr.rel (%p263) target = $region48
      $region47: #{residual_block_forward.3} parent=39 // pred_region
        %p266 = scmp.lt.s32.totalorder %s14, 1
        %s267 = scalar_select %p266, %s14, 1
        %s268 = smul.addr %s267, 8
        %s269 = smul.addr %s268, 4
        %s270 = scalar_lea.vmem %s5, %s269
      $region48: #{residual_block_forward.3} parent=39 // pred_fallthru
        _
    $region40: #{residual_block_forward.3} parent=5 // pred_fallthru
      _
    %p271 = scmp.le.s32.totalorder 1, %s14
    %p272 = scmp.lt.s32.totalorder %s14, 3
    %p273 = pnand %p271, %p272
    %p274 = pneg %p273
    // Predicated region
    $region49: #{residual_block_forward.3} parent=5 // pred_check
      _
    $region50: #{residual_block_forward.3} parent=5 // pred_check_branch
      %276 = sbr.rel (%p273) target = $region52
    $region51: #{residual_block_forward.3} parent=5 // pred_region
      %s277 = ssub.s32 %s14, 1
      %p278 = scmp.lt.s32.totalorder %s19, 1
      %s279 = scalar_select %p278, %s19, 1
      %s280 = smul.addr %s279, 72
      %s281 = smul.addr %s280, 4
      %s282 = scalar_lea.vmem %s0, %s281
      %p283 = pneg %p40
      %p284 = pneg %p37
      %p285 = pneg %p61
      %p286 = pneg %p58
      %p287 = pneg %p82
      %p288 = pneg %p79
      %p289 = pneg %p103
      %p290 = pneg %p100
      %p291 = pneg %p124
      %p292 = pneg %p121
      %p293 = scmp.lt.s32.totalorder %s19, 1
      %s294 = scalar_select %p293, %s19, 1
      %s295 = smul.addr %s294, 8
      %s296 = smul.addr %s295, 4
      %s297 = scalar_lea.vmem %s5, %s296
      %p298 = pneg %p150
      %p299 = pneg %p147
      %p300 = pneg %p171
      %p301 = pneg %p168
      %p302 = pneg %p192
      %p303 = pneg %p189
      %p304 = pneg %p218
      %p305 = pneg %p215
      %p306 = scmp.lt.s32.totalorder %s19, 1
      %s307 = scalar_select %p306, %s19, 1
      %s308 = smul.addr %s307, 8
      %s309 = smul.addr %s308, 4
      %s310 = scalar_lea.vmem %s8, %s309
      %p311 = scmp.lt.s32.totalorder %s19, 1
      %s312 = scalar_select %p311, %s19, 1
      %s313 = smul.addr %s312, 72
      %s314 = smul.addr %s313, 4
      %s315 = scalar_lea.vmem %s0, %s314
      %p316 = scmp.lt.s32.totalorder %s19, 1
      %s317 = scalar_select %p316, %s19, 1
      %s318 = smul.addr %s317, 8
      %s319 = smul.addr %s318, 4
      %s320 = scalar_lea.vmem %s5, %s319
      %p321 = scmp.lt.s32.totalorder %s19, 1
      %s322 = scalar_select %p321, %s19, 1
      %s323 = smul.addr %s322, 8
      %s324 = smul.addr %s323, 4
      %s325 = scalar_lea.vmem %s8, %s324
      %v327 = vld [vmem:[%s315] sm:$0xf]
      %v328 = vld [vmem:[%s315 + $0x8] sm:$0xf]
      %v329 = vld [vmem:[%s315 + $0x10] sm:$0xf]
      %v330 = vld [vmem:[%s315 + $0x18] sm:$0xf]
      %v331 = vld [vmem:[%s315 + $0x20] sm:$0xf]
      %v332 = vld [vmem:[%s315 + $0x28] sm:$0xf]
      %v333 = vld [vmem:[%s315 + $0x30] sm:$0xf]
      %v334 = vld [vmem:[%s315 + $0x38] sm:$0xf]
      %s335 = scalar_lea.vmem %s315, 72
      %v336 = vld [vmem:[%s335] sm:$0xf]
      %v337 = vld [vmem:[%s335 + $0x8] sm:$0xf]
      %v338 = vld [vmem:[%s335 + $0x10] sm:$0xf]
      %v339 = vld [vmem:[%s335 + $0x18] sm:$0xf]
      %v340 = vld [vmem:[%s335 + $0x20] sm:$0xf]
      %v341 = vld [vmem:[%s335 + $0x28] sm:$0xf]
      %v342 = vld [vmem:[%s335 + $0x30] sm:$0xf]
      %v343 = vld [vmem:[%s335 + $0x38] sm:$0xf]
      %v344 = vld [vmem:[%s315 + $0x4] sm:$0x1]
      %v345 = vld [vmem:[%s315 + $0xc] sm:$0x1]
      %v346 = vld [vmem:[%s315 + $0x14] sm:$0x1]
      %v347 = vld [vmem:[%s315 + $0x1c] sm:$0x1]
      %v348 = vld [vmem:[%s315 + $0x24] sm:$0x1]
      %v349 = vld [vmem:[%s315 + $0x2c] sm:$0x1]
      %v350 = vld [vmem:[%s315 + $0x34] sm:$0x1]
      %v351 = vld [vmem:[%s315 + $0x3c] sm:$0x1]
      %vm352 = vsmask.f32 3328
      %vm353 = vsmask.f32 7440
      %vm354 = vmor %vm352, %vm353
      %v356 = vshrl.u32 %v327, 16
      %v358 = vrot.slane %v356, 4
      %v359 = vshll.u32 %v327, 16
      %v361 = vrot.slane %v359, 5
      %v362 = vor.u32 %v358, %v361
      %v363 = vrot.slane %v362, 4
      %v365 = vshll.u32 %v344, 16
      %v367 = vrot.slane %v365, 5
      %v368 = vsel %vm354, %v363, %v367
      %v370 = vshrl.u32 %v328, 16
      %v372 = vrot.slane %v370, 4
      %v373 = vshll.u32 %v328, 16
      %v375 = vrot.slane %v373, 5
      %v376 = vor.u32 %v372, %v375
      %v377 = vrot.slane %v376, 4
      %v379 = vshll.u32 %v345, 16
      %v381 = vrot.slane %v379, 5
      %v382 = vsel %vm354, %v377, %v381
      %v384 = vshrl.u32 %v329, 16
      %v386 = vrot.slane %v384, 4
      %v387 = vshll.u32 %v329, 16
      %v389 = vrot.slane %v387, 5
      %v390 = vor.u32 %v386, %v389
      %v391 = vrot.slane %v390, 4
      %v393 = vshll.u32 %v346, 16
      %v395 = vrot.slane %v393, 5
      %v396 = vsel %vm354, %v391, %v395
      %v398 = vshrl.u32 %v330, 16
      %v400 = vrot.slane %v398, 4
      %v401 = vshll.u32 %v330, 16
      %v403 = vrot.slane %v401, 5
      %v404 = vor.u32 %v400, %v403
      %v405 = vrot.slane %v404, 4
      %v407 = vshll.u32 %v347, 16
      %v409 = vrot.slane %v407, 5
      %v410 = vsel %vm354, %v405, %v409
      %v412 = vshrl.u32 %v331, 16
      %v414 = vrot.slane %v412, 4
      %v415 = vshll.u32 %v331, 16
      %v417 = vrot.slane %v415, 5
      %v418 = vor.u32 %v414, %v417
      %v419 = vrot.slane %v418, 4
      %v421 = vshll.u32 %v348, 16
      %v423 = vrot.slane %v421, 5
      %v424 = vsel %vm354, %v419, %v423
      %v426 = vshrl.u32 %v332, 16
      %v428 = vrot.slane %v426, 4
      %v429 = vshll.u32 %v332, 16
      %v431 = vrot.slane %v429, 5
      %v432 = vor.u32 %v428, %v431
      %v433 = vrot.slane %v432, 4
      %v435 = vshll.u32 %v349, 16
      %v437 = vrot.slane %v435, 5
      %v438 = vsel %vm354, %v433, %v437
      %v440 = vshrl.u32 %v333, 16
      %v442 = vrot.slane %v440, 4
      %v443 = vshll.u32 %v333, 16
      %v445 = vrot.slane %v443, 5
      %v446 = vor.u32 %v442, %v445
      %v447 = vrot.slane %v446, 4
      %v449 = vshll.u32 %v350, 16
      %v451 = vrot.slane %v449, 5
      %v452 = vsel %vm354, %v447, %v451
      %v454 = vshrl.u32 %v334, 16
      %v456 = vrot.slane %v454, 4
      %v457 = vshll.u32 %v334, 16
      %v459 = vrot.slane %v457, 5
      %v460 = vor.u32 %v456, %v459
      %v461 = vrot.slane %v460, 4
      %v463 = vshll.u32 %v351, 16
      %v465 = vrot.slane %v463, 5
      %v466 = vsel %vm354, %v461, %v465
      %v475 = vunpack.c.l.b16 %v327
      %v476 = vunpack.c.l.b16 %v328
      %v477 = vunpack.c.l.b16 %v329
      %v478 = vunpack.c.l.b16 %v330
      %v479 = vunpack.c.l.b16 %v331
      %v480 = vunpack.c.l.b16 %v332
      %v481 = vunpack.c.l.b16 %v333
      %v482 = vunpack.c.l.b16 %v334
      %v483 = vpack.c.b16 %v476, %v475
      %v484 = vpack.c.b16 %v478, %v477
      %v485 = vpack.c.b16 %v480, %v479
      %v486 = vpack.c.b16 %v482, %v481
      %v499 = vunpack.c.l.b16 %v336
      %v500 = vunpack.c.l.b16 %v337
      %v501 = vunpack.c.l.b16 %v338
      %v502 = vunpack.c.l.b16 %v339
      %v503 = vunpack.c.l.b16 %v340
      %v504 = vunpack.c.l.b16 %v341
      %v505 = vunpack.c.l.b16 %v342
      %v506 = vunpack.c.l.b16 %v343
      %v507 = vpack.c.b16 %v500, %v499
      %v508 = vpack.c.b16 %v502, %v501
      %v509 = vpack.c.b16 %v504, %v503
      %v510 = vpack.c.b16 %v506, %v505
      %v515 = vunpack.c.l.b16 %v368
      %v516 = vunpack.c.l.b16 %v382
      %v517 = vunpack.c.l.b16 %v396
      %v518 = vunpack.c.l.b16 %v410
      %v519 = vunpack.c.l.b16 %v424
      %v520 = vunpack.c.l.b16 %v438
      %v521 = vunpack.c.l.b16 %v452
      %v522 = vunpack.c.l.b16 %v466
      %v523 = vpack.c.b16 %v516, %v515
      %v524 = vpack.c.b16 %v518, %v517
      %v525 = vpack.c.b16 %v520, %v519
      %v526 = vpack.c.b16 %v522, %v521
      %v531 = vld [vmem:[%s1] sm:$0xf]
      %v532 = vld [vmem:[%s1 + $0x4] sm:$0xf]
      %v533 = vld [vmem:[%s1 + $0x8] sm:$0xf]
      %v534 = vld [vmem:[%s1 + $0xc] sm:$0xf]
      %v535 = vld [vmem:[%s1 + $0x10] sm:$0xf]
      %v536 = vld [vmem:[%s1 + $0x14] sm:$0xf]
      %v537 = vld [vmem:[%s1 + $0x18] sm:$0xf]
      %v538 = vld [vmem:[%s1 + $0x1c] sm:$0xf]
      %v539 = vld [vmem:[%s1 + $0x20] sm:$0xf]
      %v540 = vld [vmem:[%s1 + $0x24] sm:$0xf]
      %v541 = vld [vmem:[%s1 + $0x28] sm:$0xf]
      %v542 = vld [vmem:[%s1 + $0x2c] sm:$0xf]
      %v543 = vld [vmem:[%s1 + $0x30] sm:$0xf]
      %v544 = vld [vmem:[%s1 + $0x34] sm:$0xf]
      %v545 = vld [vmem:[%s1 + $0x38] sm:$0xf]
      %v546 = vld [vmem:[%s1 + $0x3c] sm:$0xf]
      %v547 = vld [vmem:[%s1 + $0x40] sm:$0xf]
      %v548 = vld [vmem:[%s1 + $0x44] sm:$0xf]
      %v549 = vld [vmem:[%s1 + $0x48] sm:$0xf]
      %v550 = vld [vmem:[%s1 + $0x4c] sm:$0xf]
      %v551 = vld [vmem:[%s1 + $0x50] sm:$0xf]
      %v552 = vld [vmem:[%s1 + $0x54] sm:$0xf]
      %v553 = vld [vmem:[%s1 + $0x58] sm:$0xf]
      %v554 = vld [vmem:[%s1 + $0x5c] sm:$0xf]
      %v555 = vld [vmem:[%s1 + $0x60] sm:$0xf]
      %v556 = vld [vmem:[%s1 + $0x64] sm:$0xf]
      %v557 = vld [vmem:[%s1 + $0x68] sm:$0xf]
      %v558 = vld [vmem:[%s1 + $0x6c] sm:$0xf]
      %v559 = vld [vmem:[%s1 + $0x70] sm:$0xf]
      %v560 = vld [vmem:[%s1 + $0x74] sm:$0xf]
      %v561 = vld [vmem:[%s1 + $0x78] sm:$0xf]
      %v562 = vld [vmem:[%s1 + $0x7c] sm:$0xf]
      %v563 = vld [vmem:[%s1 + $0x80] sm:$0xf]
      %v564 = vld [vmem:[%s1 + $0x84] sm:$0xf]
      %v565 = vld [vmem:[%s1 + $0x88] sm:$0xf]
      %v566 = vld [vmem:[%s1 + $0x8c] sm:$0xf]
      %v567 = vld [vmem:[%s1 + $0x90] sm:$0xf]
      %v568 = vld [vmem:[%s1 + $0x94] sm:$0xf]
      %v569 = vld [vmem:[%s1 + $0x98] sm:$0xf]
      %v570 = vld [vmem:[%s1 + $0x9c] sm:$0xf]
      %v571 = vld [vmem:[%s1 + $0xa0] sm:$0xf]
      %v572 = vld [vmem:[%s1 + $0xa4] sm:$0xf]
      %v573 = vld [vmem:[%s1 + $0xa8] sm:$0xf]
      %v574 = vld [vmem:[%s1 + $0xac] sm:$0xf]
      %v575 = vld [vmem:[%s1 + $0xb0] sm:$0xf]
      %v576 = vld [vmem:[%s1 + $0xb4] sm:$0xf]
      %v577 = vld [vmem:[%s1 + $0xb8] sm:$0xf]
      %v578 = vld [vmem:[%s1 + $0xbc] sm:$0xf]
      %s579 = scalar_lea.vmem %s315, 144
      %v580 = vld [vmem:[%s579] sm:$0xf]
      %v581 = vld [vmem:[%s579 + $0x8] sm:$0xf]
      %v582 = vld [vmem:[%s579 + $0x10] sm:$0xf]
      %v583 = vld [vmem:[%s579 + $0x18] sm:$0xf]
      %v584 = vld [vmem:[%s579 + $0x20] sm:$0xf]
      %v585 = vld [vmem:[%s579 + $0x28] sm:$0xf]
      %v586 = vld [vmem:[%s579 + $0x30] sm:$0xf]
      %v587 = vld [vmem:[%s579 + $0x38] sm:$0xf]
      %s588 = scalar_lea.vmem %s315, 216
      %v589 = vld [vmem:[%s588] sm:$0xf]
      %v590 = vld [vmem:[%s588 + $0x8] sm:$0xf]
      %v591 = vld [vmem:[%s588 + $0x10] sm:$0xf]
      %v592 = vld [vmem:[%s588 + $0x18] sm:$0xf]
      %v593 = vld [vmem:[%s588 + $0x20] sm:$0xf]
      %v594 = vld [vmem:[%s588 + $0x28] sm:$0xf]
      %v595 = vld [vmem:[%s588 + $0x30] sm:$0xf]
      %v596 = vld [vmem:[%s588 + $0x38] sm:$0xf]
      %v597 = vld [vmem:[%s579 + $0x4] sm:$0x1]
      %v598 = vld [vmem:[%s579 + $0xc] sm:$0x1]
      %v599 = vld [vmem:[%s579 + $0x14] sm:$0x1]
      %v600 = vld [vmem:[%s579 + $0x1c] sm:$0x1]
      %v601 = vld [vmem:[%s579 + $0x24] sm:$0x1]
      %v602 = vld [vmem:[%s579 + $0x2c] sm:$0x1]
      %v603 = vld [vmem:[%s579 + $0x34] sm:$0x1]
      %v604 = vld [vmem:[%s579 + $0x3c] sm:$0x1]
      %v606 = vshrl.u32 %v580, 16
      %v608 = vrot.slane %v606, 4
      %v609 = vshll.u32 %v580, 16
      %v611 = vrot.slane %v609, 5
      %v612 = vor.u32 %v608, %v611
      %v613 = vrot.slane %v612, 4
      %v615 = vshll.u32 %v597, 16
      %v617 = vrot.slane %v615, 5
      %v618 = vsel %vm354, %v613, %v617
      %v620 = vshrl.u32 %v581, 16
      %v622 = vrot.slane %v620, 4
      %v623 = vshll.u32 %v581, 16
      %v625 = vrot.slane %v623, 5
      %v626 = vor.u32 %v622, %v625
      %v627 = vrot.slane %v626, 4
      %v629 = vshll.u32 %v598, 16
      %v631 = vrot.slane %v629, 5
      %v632 = vsel %vm354, %v627, %v631
      %v634 = vshrl.u32 %v582, 16
      %v636 = vrot.slane %v634, 4
      %v637 = vshll.u32 %v582, 16
      %v639 = vrot.slane %v637, 5
      %v640 = vor.u32 %v636, %v639
      %v641 = vrot.slane %v640, 4
      %v643 = vshll.u32 %v599, 16
      %v645 = vrot.slane %v643, 5
      %v646 = vsel %vm354, %v641, %v645
      %v648 = vshrl.u32 %v583, 16
      %v650 = vrot.slane %v648, 4
      %v651 = vshll.u32 %v583, 16
      %v653 = vrot.slane %v651, 5
      %v654 = vor.u32 %v650, %v653
      %v655 = vrot.slane %v654, 4
      %v657 = vshll.u32 %v600, 16
      %v659 = vrot.slane %v657, 5
      %v660 = vsel %vm354, %v655, %v659
      %v662 = vshrl.u32 %v584, 16
      %v664 = vrot.slane %v662, 4
      %v665 = vshll.u32 %v584, 16
      %v667 = vrot.slane %v665, 5
      %v668 = vor.u32 %v664, %v667
      %v669 = vrot.slane %v668, 4
      %v671 = vshll.u32 %v601, 16
      %v673 = vrot.slane %v671, 5
      %v674 = vsel %vm354, %v669, %v673
      %v676 = vshrl.u32 %v585, 16
      %v678 = vrot.slane %v676, 4
      %v679 = vshll.u32 %v585, 16
      %v681 = vrot.slane %v679, 5
      %v682 = vor.u32 %v678, %v681
      %v683 = vrot.slane %v682, 4
      %v685 = vshll.u32 %v602, 16
      %v687 = vrot.slane %v685, 5
      %v688 = vsel %vm354, %v683, %v687
      %v690 = vshrl.u32 %v586, 16
      %v692 = vrot.slane %v690, 4
      %v693 = vshll.u32 %v586, 16
      %v695 = vrot.slane %v693, 5
      %v696 = vor.u32 %v692, %v695
      %v697 = vrot.slane %v696, 4
      %v699 = vshll.u32 %v603, 16
      %v701 = vrot.slane %v699, 5
      %v702 = vsel %vm354, %v697, %v701
      %v704 = vshrl.u32 %v587, 16
      %v706 = vrot.slane %v704, 4
      %v707 = vshll.u32 %v587, 16
      %v709 = vrot.slane %v707, 5
      %v710 = vor.u32 %v706, %v709
      %v711 = vrot.slane %v710, 4
      %v713 = vshll.u32 %v604, 16
      %v715 = vrot.slane %v713, 5
      %v716 = vsel %vm354, %v711, %v715
      %v725 = vunpack.c.l.b16 %v580
      %v726 = vunpack.c.l.b16 %v581
      %v727 = vunpack.c.l.b16 %v582
      %v728 = vunpack.c.l.b16 %v583
      %v729 = vunpack.c.l.b16 %v584
      %v730 = vunpack.c.l.b16 %v585
      %v731 = vunpack.c.l.b16 %v586
      %v732 = vunpack.c.l.b16 %v587
      %v733 = vpack.c.b16 %v726, %v725
      %v734 = vpack.c.b16 %v728, %v727
      %v735 = vpack.c.b16 %v730, %v729
      %v736 = vpack.c.b16 %v732, %v731
      %v749 = vunpack.c.l.b16 %v589
      %v750 = vunpack.c.l.b16 %v590
      %v751 = vunpack.c.l.b16 %v591
      %v752 = vunpack.c.l.b16 %v592
      %v753 = vunpack.c.l.b16 %v593
      %v754 = vunpack.c.l.b16 %v594
      %v755 = vunpack.c.l.b16 %v595
      %v756 = vunpack.c.l.b16 %v596
      %v757 = vpack.c.b16 %v750, %v749
      %v758 = vpack.c.b16 %v752, %v751
      %v759 = vpack.c.b16 %v754, %v753
      %v760 = vpack.c.b16 %v756, %v755
      %v765 = vunpack.c.l.b16 %v618
      %v766 = vunpack.c.l.b16 %v632
      %v767 = vunpack.c.l.b16 %v646
      %v768 = vunpack.c.l.b16 %v660
      %v769 = vunpack.c.l.b16 %v674
      %v770 = vunpack.c.l.b16 %v688
      %v771 = vunpack.c.l.b16 %v702
      %v772 = vunpack.c.l.b16 %v716
      %v773 = vpack.c.b16 %v766, %v765
      %v774 = vpack.c.b16 %v768, %v767
      %v775 = vpack.c.b16 %v770, %v769
      %v776 = vpack.c.b16 %v772, %v771
      %s781 = scalar_lea.vmem %s1, 192
      %v782 = vld [vmem:[%s781] sm:$0xf]
      %v783 = vld [vmem:[%s781 + $0x4] sm:$0xf]
      %v784 = vld [vmem:[%s781 + $0x8] sm:$0xf]
      %v785 = vld [vmem:[%s781 + $0xc] sm:$0xf]
      %v786 = vld [vmem:[%s781 + $0x10] sm:$0xf]
      %v787 = vld [vmem:[%s781 + $0x14] sm:$0xf]
      %v788 = vld [vmem:[%s781 + $0x18] sm:$0xf]
      %v789 = vld [vmem:[%s781 + $0x1c] sm:$0xf]
      %v790 = vld [vmem:[%s781 + $0x20] sm:$0xf]
      %v791 = vld [vmem:[%s781 + $0x24] sm:$0xf]
      %v792 = vld [vmem:[%s781 + $0x28] sm:$0xf]
      %v793 = vld [vmem:[%s781 + $0x2c] sm:$0xf]
      %v794 = vld [vmem:[%s781 + $0x30] sm:$0xf]
      %v795 = vld [vmem:[%s781 + $0x34] sm:$0xf]
      %v796 = vld [vmem:[%s781 + $0x38] sm:$0xf]
      %v797 = vld [vmem:[%s781 + $0x3c] sm:$0xf]
      %v798 = vld [vmem:[%s781 + $0x40] sm:$0xf]
      %v799 = vld [vmem:[%s781 + $0x44] sm:$0xf]
      %v800 = vld [vmem:[%s781 + $0x48] sm:$0xf]
      %v801 = vld [vmem:[%s781 + $0x4c] sm:$0xf]
      %v802 = vld [vmem:[%s781 + $0x50] sm:$0xf]
      %v803 = vld [vmem:[%s781 + $0x54] sm:$0xf]
      %v804 = vld [vmem:[%s781 + $0x58] sm:$0xf]
      %v805 = vld [vmem:[%s781 + $0x5c] sm:$0xf]
      %v806 = vld [vmem:[%s781 + $0x60] sm:$0xf]
      %v807 = vld [vmem:[%s781 + $0x64] sm:$0xf]
      %v808 = vld [vmem:[%s781 + $0x68] sm:$0xf]
      %v809 = vld [vmem:[%s781 + $0x6c] sm:$0xf]
      %v810 = vld [vmem:[%s781 + $0x70] sm:$0xf]
      %v811 = vld [vmem:[%s781 + $0x74] sm:$0xf]
      %v812 = vld [vmem:[%s781 + $0x78] sm:$0xf]
      %v813 = vld [vmem:[%s781 + $0x7c] sm:$0xf]
      %v814 = vld [vmem:[%s781 + $0x80] sm:$0xf]
      %v815 = vld [vmem:[%s781 + $0x84] sm:$0xf]
      %v816 = vld [vmem:[%s781 + $0x88] sm:$0xf]
      %v817 = vld [vmem:[%s781 + $0x8c] sm:$0xf]
      %v818 = vld [vmem:[%s781 + $0x90] sm:$0xf]
      %v819 = vld [vmem:[%s781 + $0x94] sm:$0xf]
      %v820 = vld [vmem:[%s781 + $0x98] sm:$0xf]
      %v821 = vld [vmem:[%s781 + $0x9c] sm:$0xf]
      %v822 = vld [vmem:[%s781 + $0xa0] sm:$0xf]
      %v823 = vld [vmem:[%s781 + $0xa4] sm:$0xf]
      %v824 = vld [vmem:[%s781 + $0xa8] sm:$0xf]
      %v825 = vld [vmem:[%s781 + $0xac] sm:$0xf]
      %v826 = vld [vmem:[%s781 + $0xb0] sm:$0xf]
      %v827 = vld [vmem:[%s781 + $0xb4] sm:$0xf]
      %v828 = vld [vmem:[%s781 + $0xb8] sm:$0xf]
      %v829 = vld [vmem:[%s781 + $0xbc] sm:$0xf]
      %v878 = vunpack.c.l.b16 %v782
      %v879 = vunpack.c.l.b16 %v783
      %v880 = vunpack.c.l.b16 %v784
      %v881 = vunpack.c.l.b16 %v785
      %v882 = vunpack.c.l.b16 %v786
      %v883 = vunpack.c.l.b16 %v787
      %v884 = vunpack.c.l.b16 %v788
      %v885 = vunpack.c.l.b16 %v789
      %v886 = vunpack.c.l.b16 %v790
      %v887 = vunpack.c.l.b16 %v791
      %v888 = vunpack.c.l.b16 %v792
      %v889 = vunpack.c.l.b16 %v793
      %v890 = vunpack.c.l.b16 %v794
      %v891 = vunpack.c.l.b16 %v795
      %v892 = vunpack.c.l.b16 %v796
      %v893 = vunpack.c.l.b16 %v797
      %v894 = vunpack.c.l.b16 %v798
      %v895 = vunpack.c.l.b16 %v799
      %v896 = vunpack.c.l.b16 %v800
      %v897 = vunpack.c.l.b16 %v801
      %v898 = vunpack.c.l.b16 %v802
      %v899 = vunpack.c.l.b16 %v803
      %v900 = vunpack.c.l.b16 %v804
      %v901 = vunpack.c.l.b16 %v805
      %v902 = vunpack.c.l.b16 %v806
      %v903 = vunpack.c.l.b16 %v807
      %v904 = vunpack.c.l.b16 %v808
      %v905 = vunpack.c.l.b16 %v809
      %v906 = vunpack.c.l.b16 %v810
      %v907 = vunpack.c.l.b16 %v811
      %v908 = vunpack.c.l.b16 %v812
      %v909 = vunpack.c.l.b16 %v813
      %v910 = vunpack.c.l.b16 %v814
      %v911 = vunpack.c.l.b16 %v815
      %v912 = vunpack.c.l.b16 %v816
      %v913 = vunpack.c.l.b16 %v817
      %v914 = vunpack.c.l.b16 %v818
      %v915 = vunpack.c.l.b16 %v819
      %v916 = vunpack.c.l.b16 %v820
      %v917 = vunpack.c.l.b16 %v821
      %v918 = vunpack.c.l.b16 %v822
      %v919 = vunpack.c.l.b16 %v823
      %v920 = vunpack.c.l.b16 %v824
      %v921 = vunpack.c.l.b16 %v825
      %v922 = vunpack.c.l.b16 %v826
      %v923 = vunpack.c.l.b16 %v827
      %v924 = vunpack.c.l.b16 %v828
      %v925 = vunpack.c.l.b16 %v829
      %v926 = vpack.c.b16 %v879, %v878
      %v927 = vpack.c.b16 %v881, %v880
      %v928 = vpack.c.b16 %v883, %v882
      %v929 = vpack.c.b16 %v885, %v884
      %v930 = vpack.c.b16 %v887, %v886
      %v931 = vpack.c.b16 %v889, %v888
      %v932 = vpack.c.b16 %v891, %v890
      %v933 = vpack.c.b16 %v893, %v892
      %v934 = vpack.c.b16 %v895, %v894
      %v935 = vpack.c.b16 %v897, %v896
      %v936 = vpack.c.b16 %v899, %v898
      %v937 = vpack.c.b16 %v901, %v900
      %v938 = vpack.c.b16 %v903, %v902
      %v939 = vpack.c.b16 %v905, %v904
      %v940 = vpack.c.b16 %v907, %v906
      %v941 = vpack.c.b16 %v909, %v908
      %v942 = vpack.c.b16 %v911, %v910
      %v943 = vpack.c.b16 %v913, %v912
      %v944 = vpack.c.b16 %v915, %v914
      %v945 = vpack.c.b16 %v917, %v916
      %v946 = vpack.c.b16 %v919, %v918
      %v947 = vpack.c.b16 %v921, %v920
      %v948 = vpack.c.b16 %v923, %v922
      %v949 = vpack.c.b16 %v925, %v924
      %974 = vmatprep.subr.bf16.mxu0 0
      %975 = vmatpush1.bf16.msra.mxu0 %v926
      %976 = vmatprep.subr.bf16.mxu0 0
      %977 = vmatpush1.bf16.msra.mxu0 %v927
      %978 = vmatprep.subr.bf16.mxu0 0
      %979 = vmatpush1.bf16.msra.mxu0 %v928
      %980 = vmatprep.subr.bf16.mxu0 0
      %981 = vmatpush1.bf16.msra.mxu0 %v929
      %982 = vmatprep.subr.bf16.mxu0 0
      %983 = vmatpush1.bf16.msra.mxu0 %v930
      %984 = vmatprep.subr.bf16.mxu0 0
      %985 = vmatpush1.bf16.msra.mxu0 %v931
      %986 = vmatprep.subr.bf16.mxu0 0
      %987 = vmatpush1.bf16.msra.mxu0 %v932
      %988 = vmatprep.subr.bf16.mxu0 0
      %989 = vmatpush1.bf16.msra.mxu0 %v933
      %990 = vmatprep.subr.bf16.mxu0 0
      %991 = vmatpush1.bf16.msra.mxu0 %v934
      %992 = vmatprep.subr.bf16.mxu0 0
      %993 = vmatpush1.bf16.msra.mxu0 %v935
      %994 = vmatprep.subr.bf16.mxu0 0
      %995 = vmatpush1.bf16.msra.mxu0 %v936
      %996 = vmatprep.subr.bf16.mxu0 0
      %997 = vmatpush1.bf16.msra.mxu0 %v937
      %998 = vmatprep.subr.bf16.mxu0 0
      %999 = vmatpush1.bf16.msra.mxu0 %v938
      %1000 = vmatprep.subr.bf16.mxu0 0
      %1001 = vmatpush1.bf16.msra.mxu0 %v939
      %1002 = vmatprep.subr.bf16.mxu0 0
      %1003 = vmatpush1.bf16.msra.mxu0 %v940
      %1004 = vmatprep.subr.bf16.mxu0 0
      %1005 = vmatpush1.bf16.msra.mxu0 %v941
      %1006 = vmatprep.mubr.bf16.mxu0 %v757
      %1007 = vmatmul.mubr.bf16.gmra.mrb[0].mxu0 %v733
      %v1008 = vpop.f32.mrb[0].mxu0
      %v1009 = vadd.f32 0.0, %v1008
      %v1010 = vpop.f32.mrb[0].mxu0
      %v1011 = vpop.f32.mrb[0].mxu0
      %v1012 = vadd.f32 0.0, %v1011
      %v1013 = vpop.f32.mrb[0].mxu0
      %1014 = vmatprep.mubr.bf16.mxu0 %v758
      %1015 = vmatmul.mubr.bf16.gmra.mrb[0].mxu0 %v734
      %v1016 = vpop.f32.mrb[0].mxu0
      %v1017 = vadd.f32 0.0, %v1016
      %v1018 = vpop.f32.mrb[0].mxu0
      %v1019 = vpop.f32.mrb[0].mxu0
      %v1020 = vadd.f32 0.0, %v1019
      %v1021 = vpop.f32.mrb[0].mxu0
      %1022 = vmatprep.mubr.bf16.mxu0 %v759
      %1023 = vmatmul.mubr.bf16.gmra.mrb[0].mxu0 %v735
      %v1024 = vpop.f32.mrb[0].mxu0
      %v1025 = vadd.f32 0.0, %v1024
      %v1026 = vpop.f32.mrb[0].mxu0
      %v1027 = vpop.f32.mrb[0].mxu0
      %v1028 = vadd.f32 0.0, %v1027
      %v1029 = vpop.f32.mrb[0].mxu0
      %1030 = vmatprep.mubr.bf16.mxu0 %v760
      %1031 = vmatmul.mubr.bf16.gmra.mrb[0].mxu0 %v736
      %v1032 = vpop.f32.mrb[0].mxu0
      %v1033 = vadd.f32 0.0, %v1032
      %v1034 = vpop.f32.mrb[0].mxu0
      %v1035 = vpop.f32.mrb[0].mxu0
      %v1036 = vadd.f32 0.0, %v1035
      %v1037 = vpop.f32.mrb[0].mxu0
      %1038 = vdwg.mxu0
      %1039 = vmatprep.subr.bf16.mxu0 0
      %1040 = vmatpush1.bf16.msra.mxu0 %v942
      %1041 = vmatprep.subr.bf16.mxu0 0
      %1042 = vmatpush1.bf16.msra.mxu0 %v943
      %1043 = vmatprep.subr.bf16.mxu0 0
      %1044 = vmatpush1.bf16.msra.mxu0 %v944
      %1045 = vmatprep.subr.bf16.mxu0 0
      %1046 = vmatpush1.bf16.msra.mxu0 %v945
      %1047 = vmatprep.subr.bf16.mxu0 0
      %1048 = vmatpush1.bf16.msra.mxu0 %v946
      %1049 = vmatprep.subr.bf16.mxu0 0
      %1050 = vmatpush1.bf16.msra.mxu0 %v947
      %1051 = vmatprep.subr.bf16.mxu0 0
      %1052 = vmatpush1.bf16.msra.mxu0 %v948
      %1053 = vmatprep.subr.bf16.mxu0 0
      %1054 = vmatpush1.bf16.msra.mxu0 %v949
      %1055 = vmatprep.subr.bf16.mxu0 0
      %1056 = vmatpush1.bf16.msra.mxu0 0
      %1057 = vmatprep.subr.bf16.mxu0 0
      %1058 = vmatpush1.bf16.msra.mxu0 0
      %1059 = vmatprep.subr.bf16.mxu0 0
      %1060 = vmatpush1.bf16.msra.mxu0 0
      %1061 = vmatprep.subr.bf16.mxu0 0
      %1062 = vmatpush1.bf16.msra.mxu0 0
      %1063 = vmatprep.subr.bf16.mxu0 0
      %1064 = vmatpush1.bf16.msra.mxu0 0
      %1065 = vmatprep.subr.bf16.mxu0 0
      %1066 = vmatpush1.bf16.msra.mxu0 0
      %1067 = vmatprep.subr.bf16.mxu0 0
      %1068 = vmatpush1.bf16.msra.mxu0 0
      %1069 = vmatprep.subr.bf16.mxu0 0
      %1070 = vmatpush1.bf16.msra.mxu0 0
      %1071 = vmatprep.mubr.bf16.mxu0 0
      %1072 = vmatmul.mubr.bf16.gmra.mrb[0].mxu0 %v773
      %v1073 = vpop.f32.mrb[0].mxu0
      %v1074 = vadd.f32 %v1009, %v1073
      %v1075 = vpop.f32.mrb[0].mxu0
      %v1076 = vpop.f32.mrb[0].mxu0
      %v1077 = vadd.f32 %v1012, %v1076
      %v1078 = vpop.f32.mrb[0].mxu0
      %1079 = vmatprep.mubr.bf16.mxu0 0
      %1080 = vmatmul.mubr.bf16.gmra.mrb[0].mxu0 %v774
      %v1081 = vpop.f32.mrb[0].mxu0
      %v1082 = vadd.f32 %v1017, %v1081
      %v1083 = vpop.f32.mrb[0].mxu0
      %v1084 = vpop.f32.mrb[0].mxu0
      %v1085 = vadd.f32 %v1020, %v1084
      %v1086 = vpop.f32.mrb[0].mxu0
      %1087 = vmatprep.mubr.bf16.mxu0 0
      %1088 = vmatmul.mubr.bf16.gmra.mrb[0].mxu0 %v775
      %v1089 = vpop.f32.mrb[0].mxu0
      %v1090 = vadd.f32 %v1025, %v1089
      %v1091 = vpop.f32.mrb[0].mxu0
      %v1092 = vpop.f32.mrb[0].mxu0
      %v1093 = vadd.f32 %v1028, %v1092
      %v1094 = vpop.f32.mrb[0].mxu0
      %1095 = vmatprep.mubr.bf16.mxu0 0
      %1096 = vmatmul.mubr.bf16.gmra.mrb[0].mxu0 %v776
      %v1097 = vpop.f32.mrb[0].mxu0
      %v1098 = vadd.f32 %v1033, %v1097
      %v1099 = vpop.f32.mrb[0].mxu0
      %v1100 = vpop.f32.mrb[0].mxu0
      %v1101 = vadd.f32 %v1036, %v1100
      %v1102 = vpop.f32.mrb[0].mxu0
      %1103 = vdwg.mxu0
      %v1152 = vunpack.c.l.b16 %v531
      %v1153 = vunpack.c.l.b16 %v532
      %v1154 = vunpack.c.l.b16 %v533
      %v1155 = vunpack.c.l.b16 %v534
      %v1156 = vunpack.c.l.b16 %v535
      %v1157 = vunpack.c.l.b16 %v536
      %v1158 = vunpack.c.l.b16 %v537
      %v1159 = vunpack.c.l.b16 %v538
      %v1160 = vunpack.c.l.b16 %v539
      %v1161 = vunpack.c.l.b16 %v540
      %v1162 = vunpack.c.l.b16 %v541
      %v1163 = vunpack.c.l.b16 %v542
      %v1164 = vunpack.c.l.b16 %v543
      %v1165 = vunpack.c.l.b16 %v544
      %v1166 = vunpack.c.l.b16 %v545
      %v1167 = vunpack.c.l.b16 %v546
      %v1168 = vunpack.c.l.b16 %v547
      %v1169 = vunpack.c.l.b16 %v548
      %v1170 = vunpack.c.l.b16 %v549
      %v1171 = vunpack.c.l.b16 %v550
      %v1172 = vunpack.c.l.b16 %v551
      %v1173 = vunpack.c.l.b16 %v552
      %v1174 = vunpack.c.l.b16 %v553
      %v1175 = vunpack.c.l.b16 %v554
      %v1176 = vunpack.c.l.b16 %v555
      %v1177 = vunpack.c.l.b16 %v556
      %v1178 = vunpack.c.l.b16 %v557
      %v1179 = vunpack.c.l.b16 %v558
      %v1180 = vunpack.c.l.b16 %v559
      %v1181 = vunpack.c.l.b16 %v560
      %v1182 = vunpack.c.l.b16 %v561
      %v1183 = vunpack.c.l.b16 %v562
      %v1184 = vunpack.c.l.b16 %v563
      %v1185 = vunpack.c.l.b16 %v564
      %v1186 = vunpack.c.l.b16 %v565
      %v1187 = vunpack.c.l.b16 %v566
      %v1188 = vunpack.c.l.b16 %v567
      %v1189 = vunpack.c.l.b16 %v568
      %v1190 = vunpack.c.l.b16 %v569
      %v1191 = vunpack.c.l.b16 %v570
      %v1192 = vunpack.c.l.b16 %v571
      %v1193 = vunpack.c.l.b16 %v572
      %v1194 = vunpack.c.l.b16 %v573
      %v1195 = vunpack.c.l.b16 %v574
      %v1196 = vunpack.c.l.b16 %v575
      %v1197 = vunpack.c.l.b16 %v576
      %v1198 = vunpack.c.l.b16 %v577
      %v1199 = vunpack.c.l.b16 %v578
      %v1200 = vpack.c.b16 %v1153, %v1152
      %v1201 = vpack.c.b16 %v1155, %v1154
      %v1202 = vpack.c.b16 %v1157, %v1156
      %v1203 = vpack.c.b16 %v1159, %v1158
      %v1204 = vpack.c.b16 %v1161, %v1160
      %v1205 = vpack.c.b16 %v1163, %v1162
      %v1206 = vpack.c.b16 %v1165, %v1164
      %v1207 = vpack.c.b16 %v1167, %v1166
      %v1208 = vpack.c.b16 %v1169, %v1168
      %v1209 = vpack.c.b16 %v1171, %v1170
      %v1210 = vpack.c.b16 %v1173, %v1172
      %v1211 = vpack.c.b16 %v1175, %v1174
      %v1212 = vpack.c.b16 %v1177, %v1176
      %v1213 = vpack.c.b16 %v1179, %v1178
      %v1214 = vpack.c.b16 %v1181, %v1180
      %v1215 = vpack.c.b16 %v1183, %v1182
      %v1216 = vpack.c.b16 %v1185, %v1184
      %v1217 = vpack.c.b16 %v1187, %v1186
      %v1218 = vpack.c.b16 %v1189, %v1188
      %v1219 = vpack.c.b16 %v1191, %v1190
      %v1220 = vpack.c.b16 %v1193, %v1192
      %v1221 = vpack.c.b16 %v1195, %v1194
      %v1222 = vpack.c.b16 %v1197, %v1196
      %v1223 = vpack.c.b16 %v1199, %v1198
      %1248 = vmatprep.subr.bf16.mxu0 0
      %1249 = vmatpush1.bf16.msra.mxu0 %v1200
      %1250 = vmatprep.subr.bf16.mxu0 0
      %1251 = vmatpush1.bf16.msra.mxu0 %v1201
      %1252 = vmatprep.subr.bf16.mxu0 0
      %1253 = vmatpush1.bf16.msra.mxu0 %v1202
      %1254 = vmatprep.subr.bf16.mxu0 0
      %1255 = vmatpush1.bf16.msra.mxu0 %v1203
      %1256 = vmatprep.subr.bf16.mxu0 0
      %1257 = vmatpush1.bf16.msra.mxu0 %v1204
      %1258 = vmatprep.subr.bf16.mxu0 0
      %1259 = vmatpush1.bf16.msra.mxu0 %v1205
      %1260 = vmatprep.subr.bf16.mxu0 0
      %1261 = vmatpush1.bf16.msra.mxu0 %v1206
      %1262 = vmatprep.subr.bf16.mxu0 0
      %1263 = vmatpush1.bf16.msra.mxu0 %v1207
      %1264 = vmatprep.subr.bf16.mxu0 0
      %1265 = vmatpush1.bf16.msra.mxu0 %v1208
      %1266 = vmatprep.subr.bf16.mxu0 0
      %1267 = vmatpush1.bf16.msra.mxu0 %v1209
      %1268 = vmatprep.subr.bf16.mxu0 0
      %1269 = vmatpush1.bf16.msra.mxu0 %v1210
      %1270 = vmatprep.subr.bf16.mxu0 0
      %1271 = vmatpush1.bf16.msra.mxu0 %v1211
      %1272 = vmatprep.subr.bf16.mxu0 0
      %1273 = vmatpush1.bf16.msra.mxu0 %v1212
      %1274 = vmatprep.subr.bf16.mxu0 0
      %1275 = vmatpush1.bf16.msra.mxu0 %v1213
      %1276 = vmatprep.subr.bf16.mxu0 0
      %1277 = vmatpush1.bf16.msra.mxu0 %v1214
      %1278 = vmatprep.subr.bf16.mxu0 0
      %1279 = vmatpush1.bf16.msra.mxu0 %v1215
      %1280 = vmatprep.mubr.bf16.mxu0 %v507
      %1281 = vmatmul.mubr.bf16.gmra.mrb[0].mxu0 %v483
      %v1282 = vpop.f32.mrb[0].mxu0
      %v1283 = vadd.f32 %v1074, %v1282
      %v1284 = vpop.f32.mrb[0].mxu0
      %v1285 = vpop.f32.mrb[0].mxu0
      %v1286 = vadd.f32 %v1077, %v1285
      %v1287 = vpop.f32.mrb[0].mxu0
      %1288 = vmatprep.mubr.bf16.mxu0 %v508
      %1289 = vmatmul.mubr.bf16.gmra.mrb[0].mxu0 %v484
      %v1290 = vpop.f32.mrb[0].mxu0
      %v1291 = vadd.f32 %v1082, %v1290
      %v1292 = vpop.f32.mrb[0].mxu0
      %v1293 = vpop.f32.mrb[0].mxu0
      %v1294 = vadd.f32 %v1085, %v1293
      %v1295 = vpop.f32.mrb[0].mxu0
      %1296 = vmatprep.mubr.bf16.mxu0 %v509
      %1297 = vmatmul.mubr.bf16.gmra.mrb[0].mxu0 %v485
      %v1298 = vpop.f32.mrb[0].mxu0
      %v1299 = vadd.f32 %v1090, %v1298
      %v1300 = vpop.f32.mrb[0].mxu0
      %v1301 = vpop.f32.mrb[0].mxu0
      %v1302 = vadd.f32 %v1093, %v1301
      %v1303 = vpop.f32.mrb[0].mxu0
      %1304 = vmatprep.mubr.bf16.mxu0 %v510
      %1305 = vmatmul.mubr.bf16.gmra.mrb[0].mxu0 %v486
      %v1306 = vpop.f32.mrb[0].mxu0
      %v1307 = vadd.f32 %v1098, %v1306
      %v1308 = vpop.f32.mrb[0].mxu0
      %v1309 = vpop.f32.mrb[0].mxu0
      %v1310 = vadd.f32 %v1101, %v1309
      %v1311 = vpop.f32.mrb[0].mxu0
      %1312 = vdwg.mxu0
      %1313 = vmatprep.subr.bf16.mxu0 0
      %1314 = vmatpush1.bf16.msra.mxu0 %v1216
      %1315 = vmatprep.subr.bf16.mxu0 0
      %1316 = vmatpush1.bf16.msra.mxu0 %v1217
      %1317 = vmatprep.subr.bf16.mxu0 0
      %1318 = vmatpush1.bf16.msra.mxu0 %v1218
      %1319 = vmatprep.subr.bf16.mxu0 0
      %1320 = vmatpush1.bf16.msra.mxu0 %v1219
      %1321 = vmatprep.subr.bf16.mxu0 0
      %1322 = vmatpush1.bf16.msra.mxu0 %v1220
      %1323 = vmatprep.subr.bf16.mxu0 0
      %1324 = vmatpush1.bf16.msra.mxu0 %v1221
      %1325 = vmatprep.subr.bf16.mxu0 0
      %1326 = vmatpush1.bf16.msra.mxu0 %v1222
      %1327 = vmatprep.subr.bf16.mxu0 0
      %1328 = vmatpush1.bf16.msra.mxu0 %v1223
      %1329 = vmatprep.subr.bf16.mxu0 0
      %1330 = vmatpush1.bf16.msra.mxu0 0
      %1331 = vmatprep.subr.bf16.mxu0 0
      %1332 = vmatpush1.bf16.msra.mxu0 0
      %1333 = vmatprep.subr.bf16.mxu0 0
      %1334 = vmatpush1.bf16.msra.mxu0 0
      %1335 = vmatprep.subr.bf16.mxu0 0
      %1336 = vmatpush1.bf16.msra.mxu0 0
      %1337 = vmatprep.subr.bf16.mxu0 0
      %1338 = vmatpush1.bf16.msra.mxu0 0
      %1339 = vmatprep.subr.bf16.mxu0 0
      %1340 = vmatpush1.bf16.msra.mxu0 0
      %1341 = vmatprep.subr.bf16.mxu0 0
      %1342 = vmatpush1.bf16.msra.mxu0 0
      %1343 = vmatprep.subr.bf16.mxu0 0
      %1344 = vmatpush1.bf16.msra.mxu0 0
      %1345 = vmatprep.mubr.bf16.mxu0 0
      %1346 = vmatmul.mubr.bf16.gmra.mrb[0].mxu0 %v523
      %v1347 = vpop.f32.mrb[0].mxu0
      %v1348 = vadd.f32 %v1283, %v1347
      %v1349 = vpop.f32.mrb[0].mxu0
      %v1350 = vpop.f32.mrb[0].mxu0
      %v1351 = vadd.f32 %v1286, %v1350
      %v1352 = vpop.f32.mrb[0].mxu0
      %1353 = vmatprep.mubr.bf16.mxu0 0
      %1354 = vmatmul.mubr.bf16.gmra.mrb[0].mxu0 %v524
      %v1355 = vpop.f32.mrb[0].mxu0
      %v1356 = vadd.f32 %v1291, %v1355
      %v1357 = vpop.f32.mrb[0].mxu0
      %v1358 = vpop.f32.mrb[0].mxu0
      %v1359 = vadd.f32 %v1294, %v1358
      %v1360 = vpop.f32.mrb[0].mxu0
      %1361 = vmatprep.mubr.bf16.mxu0 0
      %1362 = vmatmul.mubr.bf16.gmra.mrb[0].mxu0 %v525
      %v1363 = vpop.f32.mrb[0].mxu0
      %v1364 = vadd.f32 %v1299, %v1363
      %v1365 = vpop.f32.mrb[0].mxu0
      %v1366 = vpop.f32.mrb[0].mxu0
      %v1367 = vadd.f32 %v1302, %v1366
      %v1368 = vpop.f32.mrb[0].mxu0
      %1369 = vmatprep.mubr.bf16.mxu0 0
      %1370 = vmatmul.mubr.bf16.gmra.mrb[0].mxu0 %v526
      %v1371 = vpop.f32.mrb[0].mxu0
      %v1372 = vadd.f32 %v1307, %v1371
      %v1373 = vpop.f32.mrb[0].mxu0
      %v1374 = vpop.f32.mrb[0].mxu0
      %v1375 = vadd.f32 %v1310, %v1374
      %v1376 = vpop.f32.mrb[0].mxu0
      %1377 = vdwg.mxu0
      %s1378 = scalar_lea.vmem %s315, 8
      %v1379 = vld [vmem:[%s1378] sm:$0xf]
      %v1380 = vld [vmem:[%s1378 + $0x8] sm:$0xf]
      %v1381 = vld [vmem:[%s1378 + $0x10] sm:$0xf]
      %v1382 = vld [vmem:[%s1378 + $0x18] sm:$0xf]
      %v1383 = vld [vmem:[%s1378 + $0x20] sm:$0xf]
      %v1384 = vld [vmem:[%s1378 + $0x28] sm:$0xf]
      %v1385 = vld [vmem:[%s1378 + $0x30] sm:$0xf]
      %v1386 = vld [vmem:[%s1378 + $0x38] sm:$0xf]
      %s1387 = scalar_lea.vmem %s315, 80
      %v1388 = vld [vmem:[%s1387] sm:$0xf]
      %v1389 = vld [vmem:[%s1387 + $0x8] sm:$0xf]
      %v1390 = vld [vmem:[%s1387 + $0x10] sm:$0xf]
      %v1391 = vld [vmem:[%s1387 + $0x18] sm:$0xf]
      %v1392 = vld [vmem:[%s1387 + $0x20] sm:$0xf]
      %v1393 = vld [vmem:[%s1387 + $0x28] sm:$0xf]
      %v1394 = vld [vmem:[%s1387 + $0x30] sm:$0xf]
      %v1395 = vld [vmem:[%s1387 + $0x38] sm:$0xf]
      %v1396 = vld [vmem:[%s1378 + $0x4] sm:$0x1]
      %v1397 = vld [vmem:[%s1378 + $0xc] sm:$0x1]
      %v1398 = vld [vmem:[%s1378 + $0x14] sm:$0x1]
      %v1399 = vld [vmem:[%s1378 + $0x1c] sm:$0x1]
      %v1400 = vld [vmem:[%s1378 + $0x24] sm:$0x1]
      %v1401 = vld [vmem:[%s1378 + $0x2c] sm:$0x1]
      %v1402 = vld [vmem:[%s1378 + $0x34] sm:$0x1]
      %v1403 = vld [vmem:[%s1378 + $0x3c] sm:$0x1]
      %v1405 = vshrl.u32 %v1379, 16
      %v1407 = vrot.slane %v1405, 4
      %v1408 = vshll.u32 %v1379, 16
      %v1410 = vrot.slane %v1408, 5
      %v1411 = vor.u32 %v1407, %v1410
      %v1412 = vrot.slane %v1411, 4
      %v1414 = vshll.u32 %v1396, 16
      %v1416 = vrot.slane %v1414, 5
      %v1417 = vsel %vm354, %v1412, %v1416
      %v1419 = vshrl.u32 %v1380, 16
      %v1421 = vrot.slane %v1419, 4
      %v1422 = vshll.u32 %v1380, 16
      %v1424 = vrot.slane %v1422, 5
      %v1425 = vor.u32 %v1421, %v1424
      %v1426 = vrot.slane %v1425, 4
      %v1428 = vshll.u32 %v1397, 16
      %v1430 = vrot.slane %v1428, 5
      %v1431 = vsel %vm354, %v1426, %v1430
      %v1433 = vshrl.u32 %v1381, 16
      %v1435 = vrot.slane %v1433, 4
      %v1436 = vshll.u32 %v1381, 16
      %v1438 = vrot.slane %v1436, 5
      %v1439 = vor.u32 %v1435, %v1438
      %v1440 = vrot.slane %v1439, 4
      %v1442 = vshll.u32 %v1398, 16
      %v1444 = vrot.slane %v1442, 5
      %v1445 = vsel %vm354, %v1440, %v1444
      %v1447 = vshrl.u32 %v1382, 16
      %v1449 = vrot.slane %v1447, 4
      %v1450 = vshll.u32 %v1382, 16
      %v1452 = vrot.slane %v1450, 5
      %v1453 = vor.u32 %v1449, %v1452
      %v1454 = vrot.slane %v1453, 4
      %v1456 = vshll.u32 %v1399, 16
      %v1458 = vrot.slane %v1456, 5
      %v1459 = vsel %vm354, %v1454, %v1458
      %v1461 = vshrl.u32 %v1383, 16
      %v1463 = vrot.slane %v1461, 4
      %v1464 = vshll.u32 %v1383, 16
      %v1466 = vrot.slane %v1464, 5
      %v1467 = vor.u32 %v1463, %v1466
      %v1468 = vrot.slane %v1467, 4
      %v1470 = vshll.u32 %v1400, 16
      %v1472 = vrot.slane %v1470, 5
      %v1473 = vsel %vm354, %v1468, %v1472
      %v1475 = vshrl.u32 %v1384, 16
      %v1477 = vrot.slane %v1475, 4
      %v1478 = vshll.u32 %v1384, 16
      %v1480 = vrot.slane %v1478, 5
      %v1481 = vor.u32 %v1477, %v1480
      %v1482 = vrot.slane %v1481, 4
      %v1484 = vshll.u32 %v1401, 16
      %v1486 = vrot.slane %v1484, 5
      %v1487 = vsel %vm354, %v1482, %v1486
      %v1489 = vshrl.u32 %v1385, 16
      %v1491 = vrot.slane %v1489, 4
      %v1492 = vshll.u32 %v1385, 16
      %v1494 = vrot.slane %v1492, 5
      %v1495 = vor.u32 %v1491, %v1494
      %v1496 = vrot.slane %v1495, 4
      %v1498 = vshll.u32 %v1402, 16
      %v1500 = vrot.slane %v1498, 5
      %v1501 = vsel %vm354, %v1496, %v1500
      %v1503 = vshrl.u32 %v1386, 16
      %v1505 = vrot.slane %v1503, 4
      %v1506 = vshll.u32 %v1386, 16
      %v1508 = vrot.slane %v1506, 5
      %v1509 = vor.u32 %v1505, %v1508
      %v1510 = vrot.slane %v1509, 4
      %v1512 = vshll.u32 %v1403, 16
      %v1514 = vrot.slane %v1512, 5
      %v1515 = vsel %vm354, %v1510, %v1514
      %v1524 = vunpack.c.l.b16 %v1379
      %v1525 = vunpack.c.l.b16 %v1380
      %v1526 = vunpack.c.l.b16 %v1381
      %v1527 = vunpack.c.l.b16 %v1382
      %v1528 = vunpack.c.l.b16 %v1383
      %v1529 = vunpack.c.l.b16 %v1384
      %v1530 = vunpack.c.l.b16 %v1385
      %v1531 = vunpack.c.l.b16 %v1386
      %v1532 = vpack.c.b16 %v1525, %v1524
      %v1533 = vpack.c.b16 %v1527, %v1526
      %v1534 = vpack.c.b16 %v1529, %v1528
      %v1535 = vpack.c.b16 %v1531, %v1530
      %v1548 = vunpack.c.l.b16 %v1388
      %v1549 = vunpack.c.l.b16 %v1389
      %v1550 = vunpack.c.l.b16 %v1390
      %v1551 = vunpack.c.l.b16 %v1391
      %v1552 = vunpack.c.l.b16 %v1392
      %v1553 = vunpack.c.l.b16 %v1393
      %v1554 = vunpack.c.l.b16 %v1394
      %v1555 = vunpack.c.l.b16 %v1395
      %v1556 = vpack.c.b16 %v1549, %v1548
      %v1557 = vpack.c.b16 %v1551, %v1550
      %v1558 = vpack.c.b16 %v1553, %v1552
      %v1559 = vpack.c.b16 %v1555, %v1554
      %v1564 = vunpack.c.l.b16 %v1417
      %v1565 = vunpack.c.l.b16 %v1431
      %v1566 = vunpack.c.l.b16 %v1445
      %v1567 = vunpack.c.l.b16 %v1459
      %v1568 = vunpack.c.l.b16 %v1473
      %v1569 = vunpack.c.l.b16 %v1487
      %v1570 = vunpack.c.l.b16 %v1501
      %v1571 = vunpack.c.l.b16 %v1515
      %v1572 = vpack.c.b16 %v1565, %v1564
      %v1573 = vpack.c.b16 %v1567, %v1566
      %v1574 = vpack.c.b16 %v1569, %v1568
      %v1575 = vpack.c.b16 %v1571, %v1570
      %s1580 = scalar_lea.vmem %s1, 384
      %v1581 = vld [vmem:[%s1580] sm:$0xf]
      %v1582 = vld [vmem:[%s1580 + $0x4] sm:$0xf]
      %v1583 = vld [vmem:[%s1580 + $0x8] sm:$0xf]
      %v1584 = vld [vmem:[%s1580 + $0xc] sm:$0xf]
      %v1585 = vld [vmem:[%s1580 + $0x10] sm:$0xf]
      %v1586 = vld [vmem:[%s1580 + $0x14] sm:$0xf]
      %v1587 = vld [vmem:[%s1580 + $0x18] sm:$0xf]
      %v1588 = vld [vmem:[%s1580 + $0x1c] sm:$0xf]
      %v1589 = vld [vmem:[%s1580 + $0x20] sm:$0xf]
      %v1590 = vld [vmem:[%s1580 + $0x24] sm:$0xf]
      %v1591 = vld [vmem:[%s1580 + $0x28] sm:$0xf]
      %v1592 = vld [vmem:[%s1580 + $0x2c] sm:$0xf]
      %v1593 = vld [vmem:[%s1580 + $0x30] sm:$0xf]
      %v1594 = vld [vmem:[%s1580 + $0x34] sm:$0xf]
      %v1595 = vld [vmem:[%s1580 + $0x38] sm:$0xf]
      %v1596 = vld [vmem:[%s1580 + $0x3c] sm:$0xf]
      %v1597 = vld [vmem:[%s1580 + $0x40] sm:$0xf]
      %v1598 = vld [vmem:[%s1580 + $0x44] sm:$0xf]
      %v1599 = vld [vmem:[%s1580 + $0x48] sm:$0xf]
      %v1600 = vld [vmem:[%s1580 + $0x4c] sm:$0xf]
      %v1601 = vld [vmem:[%s1580 + $0x50] sm:$0xf]
      %v1602 = vld [vmem:[%s1580 + $0x54] sm:$0xf]
      %v1603 = vld [vmem:[%s1580 + $0x58] sm:$0xf]
      %v1604 = vld [vmem:[%s1580 + $0x5c] sm:$0xf]
      %v1605 = vld [vmem:[%s1580 + $0x60] sm:$0xf]
      %v1606 = vld [vmem:[%s1580 + $0x64] sm:$0xf]
      %v1607 = vld [vmem:[%s1580 + $0x68] sm:$0xf]
      %v1608 = vld [vmem:[%s1580 + $0x6c] sm:$0xf]
      %v1609 = vld [vmem:[%s1580 + $0x70] sm:$0xf]
      %v1610 = vld [vmem:[%s1580 + $0x74] sm:$0xf]
      %v1611 = vld [vmem:[%s1580 + $0x78] sm:$0xf]
      %v1612 = vld [vmem:[%s1580 + $0x7c] sm:$0xf]
      %v1613 = vld [vmem:[%s1580 + $0x80] sm:$0xf]
      %v1614 = vld [vmem:[%s1580 + $0x84] sm:$0xf]
      %v1615 = vld [vmem:[%s1580 + $0x88] sm:$0xf]
      %v1616 = vld [vmem:[%s1580 + $0x8c] sm:$0xf]
      %v1617 = vld [vmem:[%s1580 + $0x90] sm:$0xf]
      %v1618 = vld [vmem:[%s1580 + $0x94] sm:$0xf]
      %v1619 = vld [vmem:[%s1580 + $0x98] sm:$0xf]
      %v1620 = vld [vmem:[%s1580 + $0x9c] sm:$0xf]
      %v1621 = vld [vmem:[%s1580 + $0xa0] sm:$0xf]
      %v1622 = vld [vmem:[%s1580 + $0xa4] sm:$0xf]
      %v1623 = vld [vmem:[%s1580 + $0xa8] sm:$0xf]
      %v1624 = vld [vmem:[%s1580 + $0xac] sm:$0xf]
      %v1625 = vld [vmem:[%s1580 + $0xb0] sm:$0xf]
      %v1626 = vld [vmem:[%s1580 + $0xb4] sm:$0xf]
      %v1627 = vld [vmem:[%s1580 + $0xb8] sm:$0xf]
      %v1628 = vld [vmem:[%s1580 + $0xbc] sm:$0xf]
      %v1677 = vunpack.c.l.b16 %v1581
      %v1678 = vunpack.c.l.b16 %v1582
      %v1679 = vunpack.c.l.b16 %v1583
      %v1680 = vunpack.c.l.b16 %v1584
      %v1681 = vunpack.c.l.b16 %v1585
      %v1682 = vunpack.c.l.b16 %v1586
      %v1683 = vunpack.c.l.b16 %v1587
      %v1684 = vunpack.c.l.b16 %v1588
      %v1685 = vunpack.c.l.b16 %v1589
      %v1686 = vunpack.c.l.b16 %v1590
      %v1687 = vunpack.c.l.b16 %v1591
      %v1688 = vunpack.c.l.b16 %v1592
      %v1689 = vunpack.c.l.b16 %v1593
      %v1690 = vunpack.c.l.b16 %v1594
      %v1691 = vunpack.c.l.b16 %v1595
      %v1692 = vunpack.c.l.b16 %v1596
      %v1693 = vunpack.c.l.b16 %v1597
      %v1694 = vunpack.c.l.b16 %v1598
      %v1695 = vunpack.c.l.b16 %v1599
      %v1696 = vunpack.c.l.b16 %v1600
      %v1697 = vunpack.c.l.b16 %v1601
      %v1698 = vunpack.c.l.b16 %v1602
      %v1699 = vunpack.c.l.b16 %v1603
      %v1700 = vunpack.c.l.b16 %v1604
      %v1701 = vunpack.c.l.b16 %v1605
      %v1702 = vunpack.c.l.b16 %v1606
      %v1703 = vunpack.c.l.b16 %v1607
      %v1704 = vunpack.c.l.b16 %v1608
      %v1705 = vunpack.c.l.b16 %v1609
      %v1706 = vunpack.c.l.b16 %v1610
      %v1707 = vunpack.c.l.b16 %v1611
      %v1708 = vunpack.c.l.b16 %v1612
      %v1709 = vunpack.c.l.b16 %v1613
      %v1710 = vunpack.c.l.b16 %v1614
      %v1711 = vunpack.c.l.b16 %v1615
      %v1712 = vunpack.c.l.b16 %v1616
      %v1713 = vunpack.c.l.b16 %v1617
      %v1714 = vunpack.c.l.b16 %v1618
      %v1715 = vunpack.c.l.b16 %v1619
      %v1716 = vunpack.c.l.b16 %v1620
      %v1717 = vunpack.c.l.b16 %v1621
      %v1718 = vunpack.c.l.b16 %v1622
      %v1719 = vunpack.c.l.b16 %v1623
      %v1720 = vunpack.c.l.b16 %v1624
      %v1721 = vunpack.c.l.b16 %v1625
      %v1722 = vunpack.c.l.b16 %v1626
      %v1723 = vunpack.c.l.b16 %v1627
      %v1724 = vunpack.c.l.b16 %v1628
      %v1725 = vpack.c.b16 %v1678, %v1677
      %v1726 = vpack.c.b16 %v1680, %v1679
      %v1727 = vpack.c.b16 %v1682, %v1681
      %v1728 = vpack.c.b16 %v1684, %v1683
      %v1729 = vpack.c.b16 %v1686, %v1685
      %v1730 = vpack.c.b16 %v1688, %v1687
      %v1731 = vpack.c.b16 %v1690, %v1689
      %v1732 = vpack.c.b16 %v1692, %v1691
      %v1733 = vpack.c.b16 %v1694, %v1693
      %v1734 = vpack.c.b16 %v1696, %v1695
      %v1735 = vpack.c.b16 %v1698, %v1697
      %v1736 = vpack.c.b16 %v1700, %v1699
      %v1737 = vpack.c.b16 %v1702, %v1701
      %v1738 = vpack.c.b16 %v1704, %v1703
      %v1739 = vpack.c.b16 %v1706, %v1705
      %v1740 = vpack.c.b16 %v1708, %v1707
      %v1741 = vpack.c.b16 %v1710, %v1709
      %v1742 = vpack.c.b16 %v1712, %v1711
      %v1743 = vpack.c.b16 %v1714, %v1713
      %v1744 = vpack.c.b16 %v1716, %v1715
      %v1745 = vpack.c.b16 %v1718, %v1717
      %v1746 = vpack.c.b16 %v1720, %v1719
      %v1747 = vpack.c.b16 %v1722, %v1721
      %v1748 = vpack.c.b16 %v1724, %v1723
      %1773 = vmatprep.subr.bf16.mxu0 0
      %1774 = vmatpush1.bf16.msra.mxu0 %v1725
      %1775 = vmatprep.subr.bf16.mxu0 0
      %1776 = vmatpush1.bf16.msra.mxu0 %v1726
      %1777 = vmatprep.subr.bf16.mxu0 0
      %1778 = vmatpush1.bf16.msra.mxu0 %v1727
      %1779 = vmatprep.subr.bf16.mxu0 0
      %1780 = vmatpush1.bf16.msra.mxu0 %v1728
      %1781 = vmatprep.subr.bf16.mxu0 0
      %1782 = vmatpush1.bf16.msra.mxu0 %v1729
      %1783 = vmatprep.subr.bf16.mxu0 0
      %1784 = vmatpush1.bf16.msra.mxu0 %v1730
      %1785 = vmatprep.subr.bf16.mxu0 0
      %1786 = vmatpush1.bf16.msra.mxu0 %v1731
      %1787 = vmatprep.subr.bf16.mxu0 0
      %1788 = vmatpush1.bf16.msra.mxu0 %v1732
      %1789 = vmatprep.subr.bf16.mxu0 0
      %1790 = vmatpush1.bf16.msra.mxu0 %v1733
      %1791 = vmatprep.subr.bf16.mxu0 0
      %1792 = vmatpush1.bf16.msra.mxu0 %v1734
      %1793 = vmatprep.subr.bf16.mxu0 0
      %1794 = vmatpush1.bf16.msra.mxu0 %v1735
      %1795 = vmatprep.subr.bf16.mxu0 0
      %1796 = vmatpush1.bf16.msra.mxu0 %v1736
      %1797 = vmatprep.subr.bf16.mxu0 0
      %1798 = vmatpush1.bf16.msra.mxu0 %v1737
      %1799 = vmatprep.subr.bf16.mxu0 0
      %1800 = vmatpush1.bf16.msra.mxu0 %v1738
      %1801 = vmatprep.subr.bf16.mxu0 0
      %1802 = vmatpush1.bf16.msra.mxu0 %v1739
      %1803 = vmatprep.subr.bf16.mxu0 0
      %1804 = vmatpush1.bf16.msra.mxu0 %v1740
      %1805 = vmatprep.mubr.bf16.mxu0 %v1556
      %1806 = vmatmul.mubr.bf16.gmra.mrb[0].mxu0 %v1532
      %v1807 = vpop.f32.mrb[0].mxu0
      %v1808 = vadd.f32 0.0, %v1807
      %v1809 = vpop.f32.mrb[0].mxu0
      %v1810 = vpop.f32.mrb[0].mxu0
      %v1811 = vadd.f32 0.0, %v1810
      %v1812 = vpop.f32.mrb[0].mxu0
      %1813 = vmatprep.mubr.bf16.mxu0 %v1557
      %1814 = vmatmul.mubr.bf16.gmra.mrb[0].mxu0 %v1533
      %v1815 = vpop.f32.mrb[0].mxu0
      %v1816 = vadd.f32 0.0, %v1815
      %v1817 = vpop.f32.mrb[0].mxu0
      %v1818 = vpop.f32.mrb[0].mxu0
      %v1819 = vadd.f32 0.0, %v1818
      %v1820 = vpop.f32.mrb[0].mxu0
      %1821 = vmatprep.mubr.bf16.mxu0 %v1558
      %1822 = vmatmul.mubr.bf16.gmra.mrb[0].mxu0 %v1534
      %v1823 = vpop.f32.mrb[0].mxu0
      %v1824 = vadd.f32 0.0, %v1823
      %v1825 = vpop.f32.mrb[0].mxu0
      %v1826 = vpop.f32.mrb[0].mxu0
      %v1827 = vadd.f32 0.0, %v1826
      %v1828 = vpop.f32.mrb[0].mxu0
      %1829 = vmatprep.mubr.bf16.mxu0 %v1559
      %1830 = vmatmul.mubr.bf16.gmra.mrb[0].mxu0 %v1535
      %v1831 = vpop.f32.mrb[0].mxu0
      %v1832 = vadd.f32 0.0, %v1831
      %v1833 = vpop.f32.mrb[0].mxu0
      %v1834 = vpop.f32.mrb[0].mxu0
      %v1835 = vadd.f32 0.0, %v1834
      %v1836 = vpop.f32.mrb[0].mxu0
      %1837 = vdwg.mxu0
      %1838 = vmatprep.subr.bf16.mxu0 0
      %1839 = vmatpush1.bf16.msra.mxu0 %v1741
      %1840 = vmatprep.subr.bf16.mxu0 0
      %1841 = vmatpush1.bf16.msra.mxu0 %v1742
      %1842 = vmatprep.subr.bf16.mxu0 0
      %1843 = vmatpush1.bf16.msra.mxu0 %v1743
      %1844 = vmatprep.subr.bf16.mxu0 0
      %1845 = vmatpush1.bf16.msra.mxu0 %v1744
      %1846 = vmatprep.subr.bf16.mxu0 0
      %1847 = vmatpush1.bf16.msra.mxu0 %v1745
      %1848 = vmatprep.subr.bf16.mxu0 0
      %1849 = vmatpush1.bf16.msra.mxu0 %v1746
      %1850 = vmatprep.subr.bf16.mxu0 0
      %1851 = vmatpush1.bf16.msra.mxu0 %v1747
      %1852 = vmatprep.subr.bf16.mxu0 0
      %1853 = vmatpush1.bf16.msra.mxu0 %v1748
      %1854 = vmatprep.subr.bf16.mxu0 0
      %1855 = vmatpush1.bf16.msra.mxu0 0
      %1856 = vmatprep.subr.bf16.mxu0 0
      %1857 = vmatpush1.bf16.msra.mxu0 0
      %1858 = vmatprep.subr.bf16.mxu0 0
      %1859 = vmatpush1.bf16.msra.mxu0 0
      %1860 = vmatprep.subr.bf16.mxu0 0
      %1861 = vmatpush1.bf16.msra.mxu0 0
      %1862 = vmatprep.subr.bf16.mxu0 0
      %1863 = vmatpush1.bf16.msra.mxu0 0
      %1864 = vmatprep.subr.bf16.mxu0 0
      %1865 = vmatpush1.bf16.msra.mxu0 0
      %1866 = vmatprep.subr.bf16.mxu0 0
      %1867 = vmatpush1.bf16.msra.mxu0 0
      %1868 = vmatprep.subr.bf16.mxu0 0
      %1869 = vmatpush1.bf16.msra.mxu0 0
      %1870 = vmatprep.mubr.bf16.mxu0 0
      %1871 = vmatmul.mubr.bf16.gmra.mrb[0].mxu0 %v1572
      %v1872 = vpop.f32.mrb[0].mxu0
      %v1873 = vadd.f32 %v1808, %v1872
      %v1874 = vpop.f32.mrb[0].mxu0
      %v1875 = vpop.f32.mrb[0].mxu0
      %v1876 = vadd.f32 %v1811, %v1875
      %v1877 = vpop.f32.mrb[0].mxu0
      %1878 = vmatprep.mubr.bf16.mxu0 0
      %1879 = vmatmul.mubr.bf16.gmra.mrb[0].mxu0 %v1573
      %v1880 = vpop.f32.mrb[0].mxu0
      %v1881 = vadd.f32 %v1816, %v1880
      %v1882 = vpop.f32.mrb[0].mxu0
      %v1883 = vpop.f32.mrb[0].mxu0
      %v1884 = vadd.f32 %v1819, %v1883
      %v1885 = vpop.f32.mrb[0].mxu0
      %1886 = vmatprep.mubr.bf16.mxu0 0
      %1887 = vmatmul.mubr.bf16.gmra.mrb[0].mxu0 %v1574
      %v1888 = vpop.f32.mrb[0].mxu0
      %v1889 = vadd.f32 %v1824, %v1888
      %v1890 = vpop.f32.mrb[0].mxu0
      %v1891 = vpop.f32.mrb[0].mxu0
      %v1892 = vadd.f32 %v1827, %v1891
      %v1893 = vpop.f32.mrb[0].mxu0
      %1894 = vmatprep.mubr.bf16.mxu0 0
      %1895 = vmatmul.mubr.bf16.gmra.mrb[0].mxu0 %v1575
      %v1896 = vpop.f32.mrb[0].mxu0
      %v1897 = vadd.f32 %v1832, %v1896
      %v1898 = vpop.f32.mrb[0].mxu0
      %v1899 = vpop.f32.mrb[0].mxu0
      %v1900 = vadd.f32 %v1835, %v1899
      %v1901 = vpop.f32.mrb[0].mxu0
      %1902 = vdwg.mxu0
      %v1903 = vadd.f32 %v1348, %v1873
      %v1904 = vadd.f32 %v1351, %v1876
      %v1905 = vadd.f32 %v1356, %v1881
      %v1906 = vadd.f32 %v1359, %v1884
      %v1907 = vadd.f32 %v1364, %v1889
      %v1908 = vadd.f32 %v1367, %v1892
      %v1909 = vadd.f32 %v1372, %v1897
      %v1910 = vadd.f32 %v1375, %v1900
      %v1911 = vld [vmem:[%s2] sm:$0x1]
      %v1913 = vlaneseq
      %v1914 = vshrl.u32 %v1913, 7
      %v1915 = vsub.s32 0, %v1914
      %v1916 = vrot.slane %v1911, %v1915
      %v1918 = vadd.f32 %v1903, %v1916
      %v1919 = vadd.f32 %v1904, %v1916
      %v1920 = vadd.f32 %v1905, %v1916
      %v1921 = vadd.f32 %v1906, %v1916
      %v1922 = vadd.f32 %v1907, %v1916
      %v1923 = vadd.f32 %v1908, %v1916
      %v1924 = vadd.f32 %v1909, %v1916
      %v1925 = vadd.f32 %v1910, %v1916
      %v1926 = vpack.c.bf16 %v1919, %v1918
      %v1927 = vpack.c.bf16 %v1921, %v1920
      %v1928 = vpack.c.bf16 %v1923, %v1922
      %v1929 = vpack.c.bf16 %v1925, %v1924
      %v1930 = vld [vmem:[%s3] sm:$0xf]
      %v1931 = vld [vmem:[%s3 + $0x4] sm:$0xf]
      %v1932 = vld [vmem:[%s3 + $0x8] sm:$0xf]
      %v1933 = vld [vmem:[%s3 + $0xc] sm:$0xf]
      %v1934 = vld [vmem:[%s3 + $0x10] sm:$0xf]
      %v1935 = vld [vmem:[%s3 + $0x14] sm:$0xf]
      %v1936 = vld [vmem:[%s3 + $0x18] sm:$0xf]
      %v1937 = vld [vmem:[%s3 + $0x1c] sm:$0xf]
      %v1938 = vld [vmem:[%s3 + $0x20] sm:$0xf]
      %v1939 = vld [vmem:[%s3 + $0x24] sm:$0xf]
      %v1940 = vld [vmem:[%s3 + $0x28] sm:$0xf]
      %v1941 = vld [vmem:[%s3 + $0x2c] sm:$0xf]
      %v1942 = vld [vmem:[%s3 + $0x30] sm:$0xf]
      %v1943 = vld [vmem:[%s3 + $0x34] sm:$0xf]
      %v1944 = vld [vmem:[%s3 + $0x38] sm:$0xf]
      %v1945 = vld [vmem:[%s3 + $0x3c] sm:$0xf]
      %v1946 = vld [vmem:[%s4] sm:$0x1]
      %v1948 = vlaneseq
      %v1949 = vshrl.u32 %v1948, 7
      %v1950 = vsub.s32 0, %v1949
      %v1951 = vrot.slane %v1946, %v1950
      %v1969 = vunpack.c.l.b16 %v1930
      %v1970 = vunpack.c.l.b16 %v1931
      %v1971 = vunpack.c.l.b16 %v1932
      %v1972 = vunpack.c.l.b16 %v1933
      %v1973 = vunpack.c.l.b16 %v1934
      %v1974 = vunpack.c.l.b16 %v1935
      %v1975 = vunpack.c.l.b16 %v1936
      %v1976 = vunpack.c.l.b16 %v1937
      %v1977 = vunpack.c.l.b16 %v1938
      %v1978 = vunpack.c.l.b16 %v1939
      %v1979 = vunpack.c.l.b16 %v1940
      %v1980 = vunpack.c.l.b16 %v1941
      %v1981 = vunpack.c.l.b16 %v1942
      %v1982 = vunpack.c.l.b16 %v1943
      %v1983 = vunpack.c.l.b16 %v1944
      %v1984 = vunpack.c.l.b16 %v1945
      %v1985 = vpack.c.b16 %v1970, %v1969
      %v1986 = vpack.c.b16 %v1972, %v1971
      %v1987 = vpack.c.b16 %v1974, %v1973
      %v1988 = vpack.c.b16 %v1976, %v1975
      %v1989 = vpack.c.b16 %v1978, %v1977
      %v1990 = vpack.c.b16 %v1980, %v1979
      %v1991 = vpack.c.b16 %v1982, %v1981
      %v1992 = vpack.c.b16 %v1984, %v1983
      %2001 = vmatprep.subr.bf16.mxu0 0
      %2002 = vmatpush1.bf16.msra.mxu0 %v1985
      %2003 = vmatprep.subr.bf16.mxu0 0
      %2004 = vmatpush1.bf16.msra.mxu0 %v1986
      %2005 = vmatprep.subr.bf16.mxu0 0
      %2006 = vmatpush1.bf16.msra.mxu0 %v1987
      %2007 = vmatprep.subr.bf16.mxu0 0
      %2008 = vmatpush1.bf16.msra.mxu0 %v1988
      %2009 = vmatprep.subr.bf16.mxu0 0
      %2010 = vmatpush1.bf16.msra.mxu0 %v1989
      %2011 = vmatprep.subr.bf16.mxu0 0
      %2012 = vmatpush1.bf16.msra.mxu0 %v1990
      %2013 = vmatprep.subr.bf16.mxu0 0
      %2014 = vmatpush1.bf16.msra.mxu0 %v1991
      %2015 = vmatprep.subr.bf16.mxu0 0
      %2016 = vmatpush1.bf16.msra.mxu0 %v1992
      %2017 = vmatprep.subr.bf16.mxu0 0
      %2018 = vmatpush1.bf16.msra.mxu0 0
      %2019 = vmatprep.subr.bf16.mxu0 0
      %2020 = vmatpush1.bf16.msra.mxu0 0
      %2021 = vmatprep.subr.bf16.mxu0 0
      %2022 = vmatpush1.bf16.msra.mxu0 0
      %2023 = vmatprep.subr.bf16.mxu0 0
      %2024 = vmatpush1.bf16.msra.mxu0 0
      %2025 = vmatprep.subr.bf16.mxu0 0
      %2026 = vmatpush1.bf16.msra.mxu0 0
      %2027 = vmatprep.subr.bf16.mxu0 0
      %2028 = vmatpush1.bf16.msra.mxu0 0
      %2029 = vmatprep.subr.bf16.mxu0 0
      %2030 = vmatpush1.bf16.msra.mxu0 0
      %2031 = vmatprep.subr.bf16.mxu0 0
      %2032 = vmatpush1.bf16.msra.mxu0 0
      %2033 = vmatprep.mubr.bf16.mxu0 0
      %2034 = vmatmul.mubr.bf16.gmra.mrb[0].mxu0 %v1926
      %v2035 = vpop.f32.mrb[0].mxu0
      %v2036 = vadd.f32 %v1951, %v2035
      %v2037 = vpop.f32.mrb[0].mxu0
      %v2038 = vpop.f32.mrb[0].mxu0
      %v2039 = vadd.f32 %v1951, %v2038
      %v2040 = vpop.f32.mrb[0].mxu0
      %2041 = vmatprep.mubr.bf16.mxu0 0
      %2042 = vmatmul.mubr.bf16.gmra.mrb[0].mxu0 %v1927
      %v2043 = vpop.f32.mrb[0].mxu0
      %v2044 = vadd.f32 %v1951, %v2043
      %v2045 = vpop.f32.mrb[0].mxu0
      %v2046 = vpop.f32.mrb[0].mxu0
      %v2047 = vadd.f32 %v1951, %v2046
      %v2048 = vpop.f32.mrb[0].mxu0
      %2049 = vmatprep.mubr.bf16.mxu0 0
      %2050 = vmatmul.mubr.bf16.gmra.mrb[0].mxu0 %v1928
      %v2051 = vpop.f32.mrb[0].mxu0
      %v2052 = vadd.f32 %v1951, %v2051
      %v2053 = vpop.f32.mrb[0].mxu0
      %v2054 = vpop.f32.mrb[0].mxu0
      %v2055 = vadd.f32 %v1951, %v2054
      %v2056 = vpop.f32.mrb[0].mxu0
      %2057 = vmatprep.mubr.bf16.mxu0 0
      %2058 = vmatmul.mubr.bf16.gmra.mrb[0].mxu0 %v1929
      %v2059 = vpop.f32.mrb[0].mxu0
      %v2060 = vadd.f32 %v1951, %v2059
      %v2061 = vpop.f32.mrb[0].mxu0
      %v2062 = vpop.f32.mrb[0].mxu0
      %v2063 = vadd.f32 %v1951, %v2062
      %v2064 = vpop.f32.mrb[0].mxu0
      %2065 = vdwg.mxu0
      %v2066 = vld [vmem:[%s320] sm:$0xf]
      %v2067 = vld [vmem:[%s320 + $0x4] sm:$0xf]
      %v2068 = vld [vmem:[%s320 + $0x8] sm:$0xf]
      %v2069 = vld [vmem:[%s320 + $0xc] sm:$0xf]
      %v2070 = vld [vmem:[%s320 + $0x10] sm:$0xf]
      %v2071 = vld [vmem:[%s320 + $0x14] sm:$0xf]
      %v2072 = vld [vmem:[%s320 + $0x18] sm:$0xf]
      %v2073 = vld [vmem:[%s320 + $0x1c] sm:$0xf]
      %v2074 = vld [vmem:[%s6] sm:$0xf]
      %v2075 = vld [vmem:[%s6 + $0x4] sm:$0xf]
      %v2076 = vld [vmem:[%s6 + $0x8] sm:$0xf]
      %v2077 = vld [vmem:[%s6 + $0xc] sm:$0xf]
      %v2078 = vld [vmem:[%s6 + $0x10] sm:$0xf]
      %v2079 = vld [vmem:[%s6 + $0x14] sm:$0xf]
      %v2080 = vld [vmem:[%s6 + $0x18] sm:$0xf]
      %v2081 = vld [vmem:[%s6 + $0x1c] sm:$0xf]
      %v2082 = vld [vmem:[%s6 + $0x20] sm:$0xf]
      %v2083 = vld [vmem:[%s6 + $0x24] sm:$0xf]
      %v2084 = vld [vmem:[%s6 + $0x28] sm:$0xf]
      %v2085 = vld [vmem:[%s6 + $0x2c] sm:$0xf]
      %v2086 = vld [vmem:[%s6 + $0x30] sm:$0xf]
      %v2087 = vld [vmem:[%s6 + $0x34] sm:$0xf]
      %v2088 = vld [vmem:[%s6 + $0x38] sm:$0xf]
      %v2089 = vld [vmem:[%s6 + $0x3c] sm:$0xf]
      %v2090 = vld [vmem:[%s7] sm:$0x1]
      %v2092 = vlaneseq
      %v2093 = vshrl.u32 %v2092, 7
      %v2094 = vsub.s32 0, %v2093
      %v2095 = vrot.slane %v2090, %v2094
      %v2105 = vunpack.c.l.b16 %v2066
      %v2106 = vunpack.c.l.b16 %v2067
      %v2107 = vunpack.c.l.b16 %v2068
      %v2108 = vunpack.c.l.b16 %v2069
      %v2109 = vunpack.c.l.b16 %v2070
      %v2110 = vunpack.c.l.b16 %v2071
      %v2111 = vunpack.c.l.b16 %v2072
      %v2112 = vunpack.c.l.b16 %v2073
      %v2113 = vpack.c.b16 %v2106, %v2105
      %v2114 = vpack.c.b16 %v2108, %v2107
      %v2115 = vpack.c.b16 %v2110, %v2109
      %v2116 = vpack.c.b16 %v2112, %v2111
      %v2137 = vunpack.c.l.b16 %v2074
      %v2138 = vunpack.c.l.b16 %v2075
      %v2139 = vunpack.c.l.b16 %v2076
      %v2140 = vunpack.c.l.b16 %v2077
      %v2141 = vunpack.c.l.b16 %v2078
      %v2142 = vunpack.c.l.b16 %v2079
      %v2143 = vunpack.c.l.b16 %v2080
      %v2144 = vunpack.c.l.b16 %v2081
      %v2145 = vunpack.c.l.b16 %v2082
      %v2146 = vunpack.c.l.b16 %v2083
      %v2147 = vunpack.c.l.b16 %v2084
      %v2148 = vunpack.c.l.b16 %v2085
      %v2149 = vunpack.c.l.b16 %v2086
      %v2150 = vunpack.c.l.b16 %v2087
      %v2151 = vunpack.c.l.b16 %v2088
      %v2152 = vunpack.c.l.b16 %v2089
      %v2153 = vpack.c.b16 %v2138, %v2137
      %v2154 = vpack.c.b16 %v2140, %v2139
      %v2155 = vpack.c.b16 %v2142, %v2141
      %v2156 = vpack.c.b16 %v2144, %v2143
      %v2157 = vpack.c.b16 %v2146, %v2145
      %v2158 = vpack.c.b16 %v2148, %v2147
      %v2159 = vpack.c.b16 %v2150, %v2149
      %v2160 = vpack.c.b16 %v2152, %v2151
      %2169 = vmatprep.subr.bf16.mxu0 0
      %2170 = vmatpush1.bf16.msra.mxu0 %v2153
      %2171 = vmatprep.subr.bf16.mxu0 0
      %2172 = vmatpush1.bf16.msra.mxu0 %v2154
      %2173 = vmatprep.subr.bf16.mxu0 0
      %2174 = vmatpush1.bf16.msra.mxu0 %v2155
      %2175 = vmatprep.subr.bf16.mxu0 0
      %2176 = vmatpush1.bf16.msra.mxu0 %v2156
      %2177 = vmatprep.subr.bf16.mxu0 0
      %2178 = vmatpush1.bf16.msra.mxu0 %v2157
      %2179 = vmatprep.subr.bf16.mxu0 0
      %2180 = vmatpush1.bf16.msra.mxu0 %v2158
      %2181 = vmatprep.subr.bf16.mxu0 0
      %2182 = vmatpush1.bf16.msra.mxu0 %v2159
      %2183 = vmatprep.subr.bf16.mxu0 0
      %2184 = vmatpush1.bf16.msra.mxu0 %v2160
      %2185 = vmatprep.subr.bf16.mxu0 0
      %2186 = vmatpush1.bf16.msra.mxu0 0
      %2187 = vmatprep.subr.bf16.mxu0 0
      %2188 = vmatpush1.bf16.msra.mxu0 0
      %2189 = vmatprep.subr.bf16.mxu0 0
      %2190 = vmatpush1.bf16.msra.mxu0 0
      %2191 = vmatprep.subr.bf16.mxu0 0
      %2192 = vmatpush1.bf16.msra.mxu0 0
      %2193 = vmatprep.subr.bf16.mxu0 0
      %2194 = vmatpush1.bf16.msra.mxu0 0
      %2195 = vmatprep.subr.bf16.mxu0 0
      %2196 = vmatpush1.bf16.msra.mxu0 0
      %2197 = vmatprep.subr.bf16.mxu0 0
      %2198 = vmatpush1.bf16.msra.mxu0 0
      %2199 = vmatprep.subr.bf16.mxu0 0
      %2200 = vmatpush1.bf16.msra.mxu0 0
      %2201 = vmatprep.mubr.bf16.mxu0 0
      %2202 = vmatmul.mubr.bf16.gmra.mrb[0].mxu0 %v2113
      %v2203 = vpop.f32.mrb[0].mxu0
      %v2204 = vadd.f32 %v2095, %v2203
      %v2205 = vpop.f32.mrb[0].mxu0
      %v2206 = vpop.f32.mrb[0].mxu0
      %v2207 = vadd.f32 %v2095, %v2206
      %v2208 = vpop.f32.mrb[0].mxu0
      %2209 = vmatprep.mubr.bf16.mxu0 0
      %2210 = vmatmul.mubr.bf16.gmra.mrb[0].mxu0 %v2114
      %v2211 = vpop.f32.mrb[0].mxu0
      %v2212 = vadd.f32 %v2095, %v2211
      %v2213 = vpop.f32.mrb[0].mxu0
      %v2214 = vpop.f32.mrb[0].mxu0
      %v2215 = vadd.f32 %v2095, %v2214
      %v2216 = vpop.f32.mrb[0].mxu0
      %2217 = vmatprep.mubr.bf16.mxu0 0
      %2218 = vmatmul.mubr.bf16.gmra.mrb[0].mxu0 %v2115
      %v2219 = vpop.f32.mrb[0].mxu0
      %v2220 = vadd.f32 %v2095, %v2219
      %v2221 = vpop.f32.mrb[0].mxu0
      %v2222 = vpop.f32.mrb[0].mxu0
      %v2223 = vadd.f32 %v2095, %v2222
      %v2224 = vpop.f32.mrb[0].mxu0
      %2225 = vmatprep.mubr.bf16.mxu0 0
      %2226 = vmatmul.mubr.bf16.gmra.mrb[0].mxu0 %v2116
      %v2227 = vpop.f32.mrb[0].mxu0
      %v2228 = vadd.f32 %v2095, %v2227
      %v2229 = vpop.f32.mrb[0].mxu0
      %v2230 = vpop.f32.mrb[0].mxu0
      %v2231 = vadd.f32 %v2095, %v2230
      %v2232 = vpop.f32.mrb[0].mxu0
      %2233 = vdwg.mxu0
      %v2234 = vadd.f32 %v2036, %v2204
      %v2235 = vadd.f32 %v2039, %v2207
      %v2236 = vadd.f32 %v2044, %v2212
      %v2237 = vadd.f32 %v2047, %v2215
      %v2238 = vadd.f32 %v2052, %v2220
      %v2239 = vadd.f32 %v2055, %v2223
      %v2240 = vadd.f32 %v2060, %v2228
      %v2241 = vadd.f32 %v2063, %v2231
      %v2242 = vmax.f32 %v2234, 0.0
      %v2243 = vmax.f32 %v2235, 0.0
      %v2244 = vmax.f32 %v2236, 0.0
      %v2245 = vmax.f32 %v2237, 0.0
      %v2246 = vmax.f32 %v2238, 0.0
      %v2247 = vmax.f32 %v2239, 0.0
      %v2248 = vmax.f32 %v2240, 0.0
      %v2249 = vmax.f32 %v2241, 0.0
      %v2250 = vpack.c.bf16 %v2242, %v2242
      %v2251 = vpack.c.bf16 %v2243, %v2243
      %v2252 = vpack.c.bf16 %v2244, %v2244
      %v2253 = vpack.c.bf16 %v2245, %v2245
      %v2254 = vpack.c.bf16 %v2246, %v2246
      %v2255 = vpack.c.bf16 %v2247, %v2247
      %v2256 = vpack.c.bf16 %v2248, %v2248
      %v2257 = vpack.c.bf16 %v2249, %v2249
      %2258 = vst [vmem:[%s325] sm:$0xf] %v2250
      %2259 = vst [vmem:[%s325 + $0x4] sm:$0xf] %v2251
      %2260 = vst [vmem:[%s325 + $0x8] sm:$0xf] %v2252
      %2261 = vst [vmem:[%s325 + $0xc] sm:$0xf] %v2253
      %2262 = vst [vmem:[%s325 + $0x10] sm:$0xf] %v2254
      %2263 = vst [vmem:[%s325 + $0x14] sm:$0xf] %v2255
      %2264 = vst [vmem:[%s325 + $0x18] sm:$0xf] %v2256
      %2265 = vst [vmem:[%s325 + $0x1c] sm:$0xf] %v2257
      %p2266 = scmp.lt.s32.totalorder %s19, 1
      %s2267 = scalar_select %p2266, %s19, 1
      %s2268 = smul.addr %s2267, 8
      %s2269 = smul.addr %s2268, 4
      %s2270 = scalar_lea.vmem %s8, %s2269
      // Predicated region
      $region53: #{residual_block_forward.3} parent=51 // pred_check
        %p2271 = pneg %p215
      $region54: #{residual_block_forward.3} parent=51 // pred_check_branch
        %2273 = sbr.rel (%p2271) target = $region56
      $region55: #{residual_block_forward.3} parent=51 // pred_region
        _
      $region56: #{residual_block_forward.3} parent=51 // pred_fallthru
        _
    $region52: #{residual_block_forward.3} parent=5 // pred_fallthru
      _
    %p2274 = scmp.le.s32.totalorder 2, %s14
    // Predicated region
    $region57: #{residual_block_forward.3} parent=5 // pred_check
      %p2275 = pneg %p2274
    $region58: #{residual_block_forward.3} parent=5 // pred_check_branch
      %2277 = sbr.rel (%p2275) target = $region60
    $region59: #{residual_block_forward.3} parent=5 // pred_region
      %s2278 = ssub.s32 %s14, 2
      // Predicated region
      $region61: #{residual_block_forward.3} parent=59 // pred_check
        %p2279 = pneg %p221
      $region62: #{residual_block_forward.3} parent=59 // pred_check_branch
        %2281 = sbr.rel (%p2279) target = $region64
      $region63: #{residual_block_forward.3} parent=59 // pred_region
        %p2282 = scmp.lt.s32.totalorder %s20, 1
        %s2283 = scalar_select %p2282, %s20, 1
        %s2284 = smul.addr %s2283, 8
        %s2285 = smul.addr %s2284, 4
        %s2286 = scalar_lea.vmem %s8, %s2285
      $region64: #{residual_block_forward.3} parent=59 // pred_fallthru
        _
    $region60: #{residual_block_forward.3} parent=5 // pred_fallthru
      _
  $region6: #{residual_block_forward.3} parent=0 // loop_footer
    %s18 = sadd.s32 1, %s14
  $region7: #{residual_block_forward.3} parent=0 // loop_footer_branch
    %13 = sbr.rel target = $region3
  $region8: #{residual_block_forward.3} parent=0 // loop_exit
    _

</llo_original>
